<compile_context>
chip_gen: v6e
topology: v6e:2x2x1
jax: 0.10.0
libtpu: 0.0.40
codegen_flags: <defaults>
</compile_context>

<pallas_src>
import numpy as np

import jax
import jax.numpy as jnp
from jax import lax
from jax.experimental import pallas as pl
from jax.experimental.pallas import tpu as pltpu

# ----------------------------- configuration --------------------------------
B = 2                              # batch
C, H, W = 4, 4, 4                  # grid state [B, C, H, W]
NUM_ACTIONS = 6
ACTION_EMBED_DIM = 4
INPUT_DIM = 64                     # state embedding dim (proj output)
OUTPUT_DIM = 64                    # predicted next-state dim
HIDDEN = 128
CONV1_OUT, CONV2_OUT = 32, 64
HWP = H * W                        # 16 spatial positions
FLAT_IN = C * HWP                  # 64   = state.view(B, -1)
FLAT1 = CONV1_OUT * HWP            # 512  = conv1 out, (c,h,w)-flattened
FLAT2 = CONV2_OUT * HWP            # 1024 = conv2 out, (c,h,w)-flattened

# ---- packed-slab layout constants -------------------------------------------
WA_M1_COL = 0                      # conv1 matrix  [FLAT_IN, FLAT1]
WA_FC1_COL = FLAT1                 # fc1 state part [INPUT_DIM, HIDDEN]
WA_FC2_COL = FLAT1 + HIDDEN        # fc2            [HIDDEN, HIDDEN]
WA_OUT_COL = FLAT1 + 2 * HIDDEN    # output head    [HIDDEN, OUTPUT_DIM] (padded)
WA_COLS = FLAT1 + 3 * HIDDEN       # 896
WB_PROJT_ROW = FLAT1               # proj^T rows live under the conv2 matrix
WB_ROWS = FLAT1 + INPUT_DIM        # 576
BIAS_ROW_B1 = 0                    # conv1 bias (FLAT1 lanes)
BIAS_ROW_B2 = 1                    # conv2 bias (FLAT2 lanes)
BIAS_ROW_MISC = 2                  # proj | fc1 | fc2 | out biases (128-lane slots)
BIAS_ROW_ACT = 8                   # folded action tables (agent0 | agent1)
BIAS_ROWS = 16
ACT_TBL_ROWS = 8                   # 6 actions + 2 zero-pad rows
BL_PROJ, BL_FC1, BL_FC2, BL_OUT = 0, 128, 256, 384


# ------------------------------ Pallas kernel --------------------------------
def grid_predictor_kernel(aidx_ref, state_ref, wa_ref, wb_ref, bias_ref, out_ref):
    f32, bf16 = jnp.float32, jnp.bfloat16

    # conv1 (3x3, pad 1) lowered to one dense matmul over the flattened grid
    x = state_ref[...].astype(bf16)                                    # [B, 64]
    m1 = wa_ref[0:FLAT_IN, WA_M1_COL:WA_M1_COL + FLAT1]                # [64, 512]
    h = jnp.dot(x, m1, preferred_element_type=f32)
    h = jnp.maximum(h + bias_ref[BIAS_ROW_B1:BIAS_ROW_B1 + 1, 0:FLAT1], 0.0)

    # conv2 lowered the same way                                         [B, 1024]
    m2 = wb_ref[0:FLAT1, :]                                            # [512, 1024]
    h = jnp.dot(h.astype(bf16), m2, preferred_element_type=f32)
    h = jnp.maximum(h + bias_ref[BIAS_ROW_B2:BIAS_ROW_B2 + 1, :], 0.0)

    # proj: transposed weight packed under M2, contracted on its lane axis
    projT = wb_ref[WB_PROJT_ROW:WB_ROWS, :]                            # [64, 1024]
    se = lax.dot_general(h.astype(bf16), projT, (((1,), (1,)), ((), ())),
                         preferred_element_type=f32)                   # [B, 64]
    se = se + bias_ref[BIAS_ROW_MISC:BIAS_ROW_MISC + 1, BL_PROJ:BL_PROJ + INPUT_DIM]

    # action embeddings folded through fc1: one-hot (from SMEM scalars) @ table
    col = lax.broadcasted_iota(jnp.int32, (B, ACT_TBL_ROWS), 1)
    row = lax.broadcasted_iota(jnp.int32, (B, ACT_TBL_ROWS), 0)
    act_add = jnp.zeros((B, HIDDEN), f32)
    for j in range(2):                                                 # 2 agents
        idx = jnp.full((B, ACT_TBL_ROWS), aidx_ref[B - 1, j], jnp.int32)
        for b in range(B - 1):
            idx = jnp.where(row == b, aidx_ref[b, j], idx)
        onehot = (col == idx).astype(f32)                              # [B, 8]
        tbl = bias_ref[BIAS_ROW_ACT:BIAS_ROW_ACT + ACT_TBL_ROWS,
                       j * HIDDEN:(j + 1) * HIDDEN]                    # [8, 128] f32
        act_add = act_add + jnp.dot(onehot, tbl, preferred_element_type=f32)

    # fc1 (ReLU) -> fc2 (ReLU) -> output head   (dropout = identity in eval)
    w_fc1 = wa_ref[0:INPUT_DIM, WA_FC1_COL:WA_FC1_COL + HIDDEN]        # [64, 128]
    h = jnp.dot(se.astype(bf16), w_fc1, preferred_element_type=f32)
    h = jnp.maximum(h + act_add
                    + bias_ref[BIAS_ROW_MISC:BIAS_ROW_MISC + 1, BL_FC1:BL_FC1 + HIDDEN],
                    0.0)
    w_fc2 = wa_ref[:, WA_FC2_COL:WA_FC2_COL + HIDDEN]                  # [128, 128]
    h = jnp.dot(h.astype(bf16), w_fc2, preferred_element_type=f32)
    h = jnp.maximum(h + bias_ref[BIAS_ROW_MISC:BIAS_ROW_MISC + 1, BL_FC2:BL_FC2 + HIDDEN],
                    0.0)
    w_out = wa_ref[:, WA_OUT_COL:WA_OUT_COL + HIDDEN]                  # cols >= 64 zero
    y = jnp.dot(h.astype(bf16), w_out, preferred_element_type=f32)
    y = y + bias_ref[BIAS_ROW_MISC:BIAS_ROW_MISC + 1, BL_OUT:BL_OUT + HIDDEN]
    out_ref[...] = y[:, 0:OUTPUT_DIM]


# ------------------------- one-time parameter packing ------------------------
def _conv3x3_as_matrix(w):
    """Dense (c,h,w)-flattened matrix of a 3x3 / pad-1 conv: y_flat = x_flat @ M."""
    cout, cin = w.shape[0], w.shape[1]
    m = np.zeros((cin, H, W, cout, H, W), np.float32)
    for kh in range(3):
        for kw in range(3):
            for ho in range(max(0, 1 - kh), min(H, H + 1 - kh)):
                for wo in range(max(0, 1 - kw), min(W, W + 1 - kw)):
                    hi, wi = ho + kh - 1, wo + kw - 1
                    m[:, hi, wi, :, ho, wo] = w[:, :, kh, kw].T
    return m.reshape(cin * H * W, cout * H * W)


def pack_params(params):
    """Pack all GridPredictor parameters into 3 slabs (2x bf16 weights + 1x f32
    bias/table slab).  Convs become dense matmuls; proj^T is stacked under the
    conv2 matrix; the action embedding is pre-folded through fc1's action columns."""
    p = {k: np.asarray(v, np.float32) for k, v in params.items()}
    m1 = _conv3x3_as_matrix(p["conv1_w"])                    # [64, 512]
    m2 = _conv3x3_as_matrix(p["conv2_w"])                    # [512, 1024]

    wa = np.zeros((HIDDEN, WA_COLS), np.float32)
    wa[0:FLAT_IN, WA_M1_COL:WA_M1_COL + FLAT1] = m1
    wa[0:INPUT_DIM, WA_FC1_COL:WA_FC1_COL + HIDDEN] = p["fc1_w"][0:INPUT_DIM, :]
    wa[:, WA_FC2_COL:WA_FC2_COL + HIDDEN] = p["fc2_w"]
    wa[:, WA_OUT_COL:WA_OUT_COL + OUTPUT_DIM] = p["out_w"]

    wb = np.zeros((WB_ROWS, FLAT2), np.float32)
    wb[0:FLAT1, :] = m2
    wb[WB_PROJT_ROW:WB_ROWS, :] = p["proj_w"].T

    bias = np.zeros((BIAS_ROWS, FLAT2), np.float32)
    bias[BIAS_ROW_B1, 0:FLAT1] = np.repeat(p["conv1_b"], HWP)
    bias[BIAS_ROW_B2, :] = np.repeat(p["conv2_b"], HWP)
    bias[BIAS_ROW_MISC, BL_PROJ:BL_PROJ + INPUT_DIM] = p["proj_b"]
    bias[BIAS_ROW_MISC, BL_FC1:BL_FC1 + HIDDEN] = p["fc1_b"]
    bias[BIAS_ROW_MISC, BL_FC2:BL_FC2 + HIDDEN] = p["fc2_b"]
    bias[BIAS_ROW_MISC, BL_OUT:BL_OUT + OUTPUT_DIM] = p["out_b"]
    for j in range(2):  # embedding @ fc1[action-columns of agent j] -> [6, 128]
        cols = p["fc1_w"][INPUT_DIM + j * ACTION_EMBED_DIM:
                          INPUT_DIM + (j + 1) * ACTION_EMBED_DIM, :]
        bias[BIAS_ROW_ACT:BIAS_ROW_ACT + NUM_ACTIONS,
             j * HIDDEN:(j + 1) * HIDDEN] = p["embedding"] @ cols

    return {"wa": jnp.asarray(wa, jnp.bfloat16),
            "wb": jnp.asarray(wb, jnp.bfloat16),
            "bias": jnp.asarray(bias, jnp.float32)}


# ------------------------------ wrapper --------------------------------------
@jax.jit
def grid_predictor_forward(state, action_indices, packed):
    """state: [B, C, H, W] f32 (NCHW); action_indices: [B, 2] int -> [B, OUTPUT_DIM]."""
    batch = state.shape[0]
    state_flat = state.reshape(batch, -1).astype(jnp.float32)   # PyTorch .view order
    return pl.pallas_call(
        grid_predictor_kernel,
        out_shape=jax.ShapeDtypeStruct((batch, OUTPUT_DIM), jnp.float32),
        in_specs=[
            pl.BlockSpec(memory_space=pltpu.MemorySpace.SMEM),   # action indices
            pl.BlockSpec(memory_space=pltpu.MemorySpace.VMEM),   # state [B, 64]
            pl.BlockSpec(memory_space=pltpu.MemorySpace.VMEM),   # slab A
            pl.BlockSpec(memory_space=pltpu.MemorySpace.VMEM),   # slab B
            pl.BlockSpec(memory_space=pltpu.MemorySpace.VMEM),   # bias/table slab
        ],
        out_specs=pl.BlockSpec(memory_space=pltpu.MemorySpace.VMEM),
    )(action_indices.astype(jnp.int32), state_flat,
      packed["wa"], packed["wb"], packed["bias"])


# --------------------------- pure-JAX f32 reference --------------------------
def reference_forward(state, action_indices, params):
    """GridPredictor eval forward in plain f32 JAX (true module semantics)."""
    batch = state.shape[0]
    x = lax.conv_general_dilated(state, params["conv1_w"], (1, 1),
                                 [(1, 1), (1, 1)],
                                 dimension_numbers=("NCHW", "OIHW", "NCHW"))
    x = jax.nn.relu(x + params["conv1_b"].reshape(1, -1, 1, 1))
    x = lax.conv_general_dilated(x, params["conv2_w"], (1, 1),
                                 [(1, 1), (1, 1)],
                                 dimension_numbers=("NCHW", "OIHW", "NCHW"))
    x = jax.nn.relu(x + params["conv2_b"].reshape(1, -1, 1, 1))
    se = x.reshape(batch, -1) @ params["proj_w"] + params["proj_b"]
    emb = params["embedding"][action_indices]                    # [B, 2, 4]
    combined = jnp.concatenate([se, emb[:, 0, :], emb[:, 1, :]], axis=1)
    h = jax.nn.relu(combined @ params["fc1_w"] + params["fc1_b"])   # dropout = id
    h = jax.nn.relu(h @ params["fc2_w"] + params["fc2_b"])          # dropout = id
    return h @ params["out_w"] + params["out_b"]


# --------------------------- deterministic params ----------------------------
def init_params(key):
    keys = iter(jax.random.split(key, 16))

    def w(shape, fan_in):
        return jax.random.normal(next(keys), shape, jnp.float32) / np.sqrt(fan_in)

    def b(shape):
        return 0.01 * jax.random.normal(next(keys), shape, jnp.float32)

    return {
        "conv1_w": w((CONV1_OUT, C, 3, 3), C * 9),          "conv1_b": b((CONV1_OUT,)),
        "conv2_w": w((CONV2_OUT, CONV1_OUT, 3, 3), CONV1_OUT * 9),
        "conv2_b": b((CONV2_OUT,)),
        "proj_w": w((FLAT2, INPUT_DIM), FLAT2),             "proj_b": b((INPUT_DIM,)),
        "embedding": jax.random.normal(next(keys), (NUM_ACTIONS, ACTION_EMBED_DIM),
                                       jnp.float32),
        "fc1_w": w((INPUT_DIM + 2 * ACTION_EMBED_DIM, HIDDEN),
                   INPUT_DIM + 2 * ACTION_EMBED_DIM),       "fc1_b": b((HIDDEN,)),
        "fc2_w": w((HIDDEN, HIDDEN), HIDDEN),               "fc2_b": b((HIDDEN,)),
        "out_w": w((HIDDEN, OUTPUT_DIM), HIDDEN),           "out_b": b((OUTPUT_DIM,)),
    }


if __name__ == "__main__":
    # TODO(synk): dropout is a train-time stochastic path; this is the eval forward
    # (dropout = identity), matching module.eval().
    # TODO(synk): amortizing the weight DMA over many forwards (grid axis over
    # rollout steps with constant-index weight BlockSpecs, and v7x dual-TensorCore
    # "parallel" sharding of independent rollouts) is a driver-level change that a
    # single forward call cannot exercise.
    pkey, skey, akey = jax.random.split(jax.random.PRNGKey(0), 3)
    params = init_params(pkey)
    packed = pack_params(params)
    assert packed["wa"].shape == (HIDDEN, WA_COLS)
    assert packed["wb"].shape == (WB_ROWS, FLAT2)
    assert packed["bias"].shape == (BIAS_ROWS, FLAT2)

    state = jax.random.normal(skey, (B, C, H, W), jnp.float32)
    action_indices = jax.random.randint(akey, (B, 2), 0, NUM_ACTIONS, jnp.int32)

    out = grid_predictor_forward(state, action_indices, packed)
    out = jax.block_until_ready(out)
    assert out.shape == (B, OUTPUT_DIM)

    ref = reference_forward(state, action_indices, params)
    # bf16 MXU weight/activation operands are a deliberate precision trade-off.
    np.testing.assert_allclose(np.asarray(out), np.asarray(ref), rtol=2e-2, atol=2e-2)
    print("KERNEL_OK")
</pallas_src>

<mosaic_0001>
module attributes {stable_mosaic.version = 11 : i64} {
  func.func @grid_predictor_kernel(%arg0: memref<2x2xi32, #tpu.memory_space<smem>>, %arg1: memref<2x64xf32, #tpu.memory_space<vmem>>, %arg2: memref<128x896xbf16, #tpu.memory_space<vmem>>, %arg3: memref<576x1024xbf16, #tpu.memory_space<vmem>>, %arg4: memref<16x1024xf32, #tpu.memory_space<vmem>>, %arg5: memref<2x64xf32, #tpu.memory_space<vmem>>) attributes {dimension_semantics = [], scalar_prefetch = 0 : i64, scratch_operands = 0 : i64, tpu.core_type = #tpu.core_type<tc>} {
    %c0 = arith.constant 0 : index
    %c0_0 = arith.constant 0 : index
    %0 = vector.load %arg1[%c0, %c0_0] : memref<2x64xf32, #tpu.memory_space<vmem>>, vector<2x64xf32>
    %1 = arith.truncf %0 : vector<2x64xf32> to vector<2x64xbf16>
    %c0_1 = arith.constant 0 : index
    %c0_2 = arith.constant 0 : index
    %2 = vector.load %arg2[%c0_1, %c0_2] : memref<128x896xbf16, #tpu.memory_space<vmem>>, vector<64x512xbf16>
    %cst = arith.constant dense<0.000000e+00> : vector<2x512xf32>
    %3 = tpu.matmul %1, %2, %cst {dimension_numbers = #tpu.dot_dimension_numbers<[1], [0], [0], [1], [0, 0, 1, 1], [], []>} : vector<2x64xbf16>, vector<64x512xbf16>, vector<2x512xf32> -> vector<2x512xf32>
    %c0_3 = arith.constant 0 : index
    %c0_4 = arith.constant 0 : index
    %4 = vector.load %arg4[%c0_3, %c0_4] : memref<16x1024xf32, #tpu.memory_space<vmem>>, vector<1x512xf32>
    %5 = vector.broadcast %4 : vector<1x512xf32> to vector<2x512xf32>
    %6 = arith.addf %3, %5 : vector<2x512xf32>
    %cst_5 = arith.constant 0.000000e+00 : f32
    %7 = vector.broadcast %cst_5 : f32 to vector<2x512xf32>
    %8 = arith.maximumf %6, %7 : vector<2x512xf32>
    %c0_6 = arith.constant 0 : index
    %c0_7 = arith.constant 0 : index
    %9 = vector.load %arg3[%c0_6, %c0_7] : memref<576x1024xbf16, #tpu.memory_space<vmem>>, vector<512x1024xbf16>
    %10 = arith.truncf %8 : vector<2x512xf32> to vector<2x512xbf16>
    %cst_8 = arith.constant dense<0.000000e+00> : vector<2x1024xf32>
    %11 = tpu.matmul %10, %9, %cst_8 {dimension_numbers = #tpu.dot_dimension_numbers<[1], [0], [0], [1], [0, 0, 1, 1], [], []>} : vector<2x512xbf16>, vector<512x1024xbf16>, vector<2x1024xf32> -> vector<2x1024xf32>
    %c1 = arith.constant 1 : index
    %c0_9 = arith.constant 0 : index
    %12 = vector.load %arg4[%c1, %c0_9] : memref<16x1024xf32, #tpu.memory_space<vmem>>, vector<1x1024xf32>
    %13 = vector.broadcast %12 : vector<1x1024xf32> to vector<2x1024xf32>
    %14 = arith.addf %11, %13 : vector<2x1024xf32>
    %cst_10 = arith.constant 0.000000e+00 : f32
    %15 = vector.broadcast %cst_10 : f32 to vector<2x1024xf32>
    %16 = arith.maximumf %14, %15 : vector<2x1024xf32>
    %c512 = arith.constant 512 : index
    %c0_11 = arith.constant 0 : index
    %17 = vector.load %arg3[%c512, %c0_11] : memref<576x1024xbf16, #tpu.memory_space<vmem>>, vector<64x1024xbf16>
    %18 = arith.truncf %16 : vector<2x1024xf32> to vector<2x1024xbf16>
    %cst_12 = arith.constant dense<0.000000e+00> : vector<2x64xf32>
    %19 = tpu.matmul %18, %17, %cst_12 {dimension_numbers = #tpu.dot_dimension_numbers<[1], [1], [0], [0], [0, 0, 1, 0], [], []>} : vector<2x1024xbf16>, vector<64x1024xbf16>, vector<2x64xf32> -> vector<2x64xf32>
    %c2 = arith.constant 2 : index
    %c0_13 = arith.constant 0 : index
    %20 = vector.load %arg4[%c2, %c0_13] : memref<16x1024xf32, #tpu.memory_space<vmem>>, vector<1x64xf32>
    %21 = vector.broadcast %20 : vector<1x64xf32> to vector<2x64xf32>
    %22 = arith.addf %19, %21 : vector<2x64xf32>
    %23 = tpu.iota {dimensions = array<i32: 1>} : vector<2x8xi32>
    %24 = tpu.iota {dimensions = array<i32: 0>} : vector<2x8xi32>
    %cst_14 = arith.constant 0.000000e+00 : f32
    %25 = vector.broadcast %cst_14 : f32 to vector<2x128xf32>
    %c1_15 = arith.constant 1 : index
    %c0_16 = arith.constant 0 : index
    %26 = memref.load %arg0[%c1_15, %c0_16] : memref<2x2xi32, #tpu.memory_space<smem>>
    %27 = vector.broadcast %26 : i32 to vector<2x8xi32>
    %c0_i32 = arith.constant 0 : i32
    %28 = vector.broadcast %c0_i32 : i32 to vector<2x8xi32>
    %29 = arith.cmpi eq, %24, %28 : vector<2x8xi32>
    %c0_17 = arith.constant 0 : index
    %c0_18 = arith.constant 0 : index
    %30 = memref.load %arg0[%c0_17, %c0_18] : memref<2x2xi32, #tpu.memory_space<smem>>
    %31 = vector.broadcast %30 : i32 to vector<2x8xi32>
    %32 = arith.select %29, %31, %27 : vector<2x8xi1>, vector<2x8xi32>
    %33 = arith.cmpi eq, %23, %32 : vector<2x8xi32>
    %34 = arith.extui %33 : vector<2x8xi1> to vector<2x8xi32>
    %35 = arith.sitofp %34 : vector<2x8xi32> to vector<2x8xf32>
    %c8 = arith.constant 8 : index
    %c0_19 = arith.constant 0 : index
    %36 = vector.load %arg4[%c8, %c0_19] : memref<16x1024xf32, #tpu.memory_space<vmem>>, vector<8x128xf32>
    %cst_20 = arith.constant dense<0.000000e+00> : vector<2x128xf32>
    %37 = tpu.matmul %35, %36, %cst_20 {dimension_numbers = #tpu.dot_dimension_numbers<[1], [0], [0], [1], [0, 0, 1, 1], [], []>} : vector<2x8xf32>, vector<8x128xf32>, vector<2x128xf32> -> vector<2x128xf32>
    %38 = arith.addf %25, %37 : vector<2x128xf32>
    %c1_21 = arith.constant 1 : index
    %c1_22 = arith.constant 1 : index
    %39 = memref.load %arg0[%c1_21, %c1_22] : memref<2x2xi32, #tpu.memory_space<smem>>
    %40 = vector.broadcast %39 : i32 to vector<2x8xi32>
    %c0_i32_23 = arith.constant 0 : i32
    %41 = vector.broadcast %c0_i32_23 : i32 to vector<2x8xi32>
    %42 = arith.cmpi eq, %24, %41 : vector<2x8xi32>
    %c0_24 = arith.constant 0 : index
    %c1_25 = arith.constant 1 : index
    %43 = memref.load %arg0[%c0_24, %c1_25] : memref<2x2xi32, #tpu.memory_space<smem>>
    %44 = vector.broadcast %43 : i32 to vector<2x8xi32>
    %45 = arith.select %42, %44, %40 : vector<2x8xi1>, vector<2x8xi32>
    %46 = arith.cmpi eq, %23, %45 : vector<2x8xi32>
    %47 = arith.extui %46 : vector<2x8xi1> to vector<2x8xi32>
    %48 = arith.sitofp %47 : vector<2x8xi32> to vector<2x8xf32>
    %c8_26 = arith.constant 8 : index
    %c128 = arith.constant 128 : index
    %49 = vector.load %arg4[%c8_26, %c128] : memref<16x1024xf32, #tpu.memory_space<vmem>>, vector<8x128xf32>
    %cst_27 = arith.constant dense<0.000000e+00> : vector<2x128xf32>
    %50 = tpu.matmul %48, %49, %cst_27 {dimension_numbers = #tpu.dot_dimension_numbers<[1], [0], [0], [1], [0, 0, 1, 1], [], []>} : vector<2x8xf32>, vector<8x128xf32>, vector<2x128xf32> -> vector<2x128xf32>
    %51 = arith.addf %38, %50 : vector<2x128xf32>
    %c0_28 = arith.constant 0 : index
    %c512_29 = arith.constant 512 : index
    %52 = vector.load %arg2[%c0_28, %c512_29] : memref<128x896xbf16, #tpu.memory_space<vmem>>, vector<64x128xbf16>
    %53 = arith.truncf %22 : vector<2x64xf32> to vector<2x64xbf16>
    %cst_30 = arith.constant dense<0.000000e+00> : vector<2x128xf32>
    %54 = tpu.matmul %53, %52, %cst_30 {dimension_numbers = #tpu.dot_dimension_numbers<[1], [0], [0], [1], [0, 0, 1, 1], [], []>} : vector<2x64xbf16>, vector<64x128xbf16>, vector<2x128xf32> -> vector<2x128xf32>
    %55 = arith.addf %54, %51 : vector<2x128xf32>
    %c2_31 = arith.constant 2 : index
    %c128_32 = arith.constant 128 : index
    %56 = vector.load %arg4[%c2_31, %c128_32] : memref<16x1024xf32, #tpu.memory_space<vmem>>, vector<1x128xf32>
    %57 = vector.broadcast %56 : vector<1x128xf32> to vector<2x128xf32>
    %58 = arith.addf %55, %57 : vector<2x128xf32>
    %cst_33 = arith.constant 0.000000e+00 : f32
    %59 = vector.broadcast %cst_33 : f32 to vector<2x128xf32>
    %60 = arith.maximumf %58, %59 : vector<2x128xf32>
    %c0_34 = arith.constant 0 : index
    %c640 = arith.constant 640 : index
    %61 = vector.load %arg2[%c0_34, %c640] : memref<128x896xbf16, #tpu.memory_space<vmem>>, vector<128x128xbf16>
    %62 = arith.truncf %60 : vector<2x128xf32> to vector<2x128xbf16>
    %cst_35 = arith.constant dense<0.000000e+00> : vector<2x128xf32>
    %63 = tpu.matmul %62, %61, %cst_35 {dimension_numbers = #tpu.dot_dimension_numbers<[1], [0], [0], [1], [0, 0, 1, 1], [], []>} : vector<2x128xbf16>, vector<128x128xbf16>, vector<2x128xf32> -> vector<2x128xf32>
    %c2_36 = arith.constant 2 : index
    %c256 = arith.constant 256 : index
    %64 = vector.load %arg4[%c2_36, %c256] : memref<16x1024xf32, #tpu.memory_space<vmem>>, vector<1x128xf32>
    %65 = vector.broadcast %64 : vector<1x128xf32> to vector<2x128xf32>
    %66 = arith.addf %63, %65 : vector<2x128xf32>
    %cst_37 = arith.constant 0.000000e+00 : f32
    %67 = vector.broadcast %cst_37 : f32 to vector<2x128xf32>
    %68 = arith.maximumf %66, %67 : vector<2x128xf32>
    %c0_38 = arith.constant 0 : index
    %c768 = arith.constant 768 : index
    %69 = vector.load %arg2[%c0_38, %c768] : memref<128x896xbf16, #tpu.memory_space<vmem>>, vector<128x128xbf16>
    %70 = arith.truncf %68 : vector<2x128xf32> to vector<2x128xbf16>
    %cst_39 = arith.constant dense<0.000000e+00> : vector<2x128xf32>
    %71 = tpu.matmul %70, %69, %cst_39 {dimension_numbers = #tpu.dot_dimension_numbers<[1], [0], [0], [1], [0, 0, 1, 1], [], []>} : vector<2x128xbf16>, vector<128x128xbf16>, vector<2x128xf32> -> vector<2x128xf32>
    %c2_40 = arith.constant 2 : index
    %c384 = arith.constant 384 : index
    %72 = vector.load %arg4[%c2_40, %c384] : memref<16x1024xf32, #tpu.memory_space<vmem>>, vector<1x128xf32>
    %73 = vector.broadcast %72 : vector<1x128xf32> to vector<2x128xf32>
    %74 = arith.addf %71, %73 : vector<2x128xf32>
    %75 = vector.extract_strided_slice %74 {offsets = [0, 0], sizes = [2, 64], strides = [1, 1]} : vector<2x128xf32> to vector<2x64xf32>
    %c0_41 = arith.constant 0 : index
    %c0_42 = arith.constant 0 : index
    %76 = vector.load %arg5[%c0_41, %c0_42] : memref<2x64xf32, #tpu.memory_space<vmem>>, vector<2x64xf32>
    tpu.vector_store %arg5[%c0_41, %c0_42], %75 {strides = array<i32>} : memref<2x64xf32, #tpu.memory_space<vmem>>, vector<2x64xf32>,
    return
  }
}

</mosaic_0001>

<llo_original>
// kernel: grid_predictor_forward.1
$region0: #{grid_predictor_forward.1}
  #allocation0 [shape = 'u32[]', space=smem, size = 0x4, offset = 0x4, fixed_abs, tag = 'smem constant byte address 0x4 - core index']
  #allocation1 [shape = 'u32[144,128]{1,0:T(1,128)}', space=vmem, size = 0x12000, scoped, tag = 'internal scratch']
  %s0 = inlined_call_operand.hbm [shape: s32[2,2], index: 0, kind: input, shape index: {}]
  %s1 = inlined_call_operand.vmem [shape: f32[2,64], index: 1, kind: input, shape index: {}]
  %s2 = inlined_call_operand.hbm [shape: bf16[128,896], index: 2, kind: input, shape index: {}]
  %s3 = inlined_call_operand.hbm [shape: bf16[576,1024], index: 3, kind: input, shape index: {}]
  %s4 = inlined_call_operand.hbm [shape: f32[16,1024], index: 4, kind: input, shape index: {}]
  %s5 = inlined_call_operand.hbm [shape: f32[2,64], index: 5, kind: output, shape index: {}]
  %s6 = sld [smem:[#allocation0]]
  $region46: #{grid_predictor_forward.1} parent=0
    _
  %s8 = ssub.s32 1, %s6
  %s9 = scalar_select 0, %s8, %s6
  $region1: #{grid_predictor_forward.1} parent=0
    #allocation2 [shape = 'u8[1024]{0}', space=smem, size = 0x400, scoped, tag = 'input window, operand 0, single buffered']
    #allocation3 [shape = 's32[1]{0}', space=sflag, size = 0x4, scoped, tag = 'scoped memory for grid_predictor_forward.1']
    #allocation4 [shape = 's32[1]{0}', space=sflag, size = 0x4, scoped, tag = 'scoped memory for grid_predictor_forward.1']
    #allocation5 [shape = 's32[1]{0}', space=sflag, size = 0x4, scoped, tag = 'scoped memory for grid_predictor_forward.1']
    #allocation6 [shape = 'u8[229376]{0}', space=vmem, size = 0x38000, scoped, tag = 'input window, operand 2, single buffered']
    #allocation7 [shape = 'u8[1179648]{0}', space=vmem, size = 0x120000, scoped, tag = 'input window, operand 3, single buffered']
    #allocation8 [shape = 's32[1]{0}', space=sflag, size = 0x4, scoped, tag = 'scoped memory for grid_predictor_forward.1']
    #allocation9 [shape = 'u8[65536]{0}', space=vmem, size = 0x10000, scoped, tag = 'input window, operand 4, single buffered']
    #allocation10 [shape = 'u8[1024]{0}', space=vmem, size = 0x400, scoped, tag = 'output window, operand 0, single buffered']
    %10 = vsyncpa [#allocation5], 0
    %11 = vsyncpa [#allocation3], 0
    %12 = vsyncpa [#allocation8], 0
    %13 = vsyncpa [#allocation4], 0
    // Predicated region
    $region2: #{grid_predictor_forward.1} parent=1 // pred_check
      _
    $region3: #{grid_predictor_forward.1} parent=1 // pred_check_branch
      %15 = sbr.rel (0) target = $region5
    $region4: #{grid_predictor_forward.1} parent=1 // pred_region
      %s17 = ssub.s32 32, 32
      %18 = vsyncadd [#allocation5], %s17
      %21 = dma.hbm_to_smem %s0, 32, [#allocation2], [#allocation5]
    $region5: #{grid_predictor_forward.1} parent=1 // pred_fallthru
      _
    // Predicated region
    $region6: #{grid_predictor_forward.1} parent=1 // pred_check
      _
    $region7: #{grid_predictor_forward.1} parent=1 // pred_check_branch
      %23 = sbr.rel (0) target = $region9
    $region8: #{grid_predictor_forward.1} parent=1 // pred_region
      _
    $region9: #{grid_predictor_forward.1} parent=1 // pred_fallthru
      _
    // Predicated region
    $region10: #{grid_predictor_forward.1} parent=1 // pred_check
      _
    $region11: #{grid_predictor_forward.1} parent=1 // pred_check_branch
      %25 = sbr.rel (0) target = $region13
    $region12: #{grid_predictor_forward.1} parent=1 // pred_region
      %s27 = ssub.s32 7168, 7168
      %28 = vsyncadd [#allocation3], %s27
      %s29 = sshll.u32 [#allocation6], 4
      %s30 = int_to_ptr.vmem [resolvable:$true] %s29
      %35 = dma.hbm_to_vmem [thread:$0]  %s2, 7168, %s30, [#allocation3], 448, 448, 28
    $region13: #{grid_predictor_forward.1} parent=1 // pred_fallthru
      _
    // Predicated region
    $region14: #{grid_predictor_forward.1} parent=1 // pred_check
      _
    $region15: #{grid_predictor_forward.1} parent=1 // pred_check_branch
      %37 = sbr.rel (0) target = $region17
    $region16: #{grid_predictor_forward.1} parent=1 // pred_region
      %s39 = ssub.s32 36864, 36864
      %40 = vsyncadd [#allocation8], %s39
      %s41 = sshll.u32 [#allocation7], 4
      %s42 = int_to_ptr.vmem [resolvable:$true] %s41
      %47 = dma.hbm_to_vmem [thread:$0]  %s3, 36864, %s42, [#allocation8], 512, 512, 32
    $region17: #{grid_predictor_forward.1} parent=1 // pred_fallthru
      _
    // Predicated region
    $region18: #{grid_predictor_forward.1} parent=1 // pred_check
      _
    $region19: #{grid_predictor_forward.1} parent=1 // pred_check_branch
      %49 = sbr.rel (0) target = $region21
    $region20: #{grid_predictor_forward.1} parent=1 // pred_region
      %s51 = ssub.s32 2048, 2048
      %52 = vsyncadd [#allocation8], %s51
      %s53 = sshll.u32 [#allocation9], 4
      %s54 = int_to_ptr.vmem [resolvable:$true] %s53
      %59 = dma.hbm_to_vmem [thread:$0]  %s4, 2048, %s54, [#allocation8], 1024, 1024, 64
    $region21: #{grid_predictor_forward.1} parent=1 // pred_fallthru
      _
    // Predicated region
    $region22: #{grid_predictor_forward.1} parent=1 // pred_check
      _
    $region23: #{grid_predictor_forward.1} parent=1 // pred_check_branch
      %61 = sbr.rel (0) target = $region25
    $region24: #{grid_predictor_forward.1} parent=1 // pred_region
      %62 = dma.done [#allocation5], 32
    $region25: #{grid_predictor_forward.1} parent=1 // pred_fallthru
      _
    // Predicated region
    $region26: #{grid_predictor_forward.1} parent=1 // pred_check
      _
    $region27: #{grid_predictor_forward.1} parent=1 // pred_check_branch
      %64 = sbr.rel (0) target = $region29
    $region28: #{grid_predictor_forward.1} parent=1 // pred_region
      %65 = dma.done [#allocation3], 7168
    $region29: #{grid_predictor_forward.1} parent=1 // pred_fallthru
      _
    // Predicated region
    $region30: #{grid_predictor_forward.1} parent=1 // pred_check
      _
    $region31: #{grid_predictor_forward.1} parent=1 // pred_check_branch
      %67 = sbr.rel (0) target = $region33
    $region32: #{grid_predictor_forward.1} parent=1 // pred_region
      %68 = dma.done [#allocation8], 36864
    $region33: #{grid_predictor_forward.1} parent=1 // pred_fallthru
      _
    // Predicated region
    $region34: #{grid_predictor_forward.1} parent=1 // pred_check
      _
    $region35: #{grid_predictor_forward.1} parent=1 // pred_check_branch
      %70 = sbr.rel (0) target = $region37
    $region36: #{grid_predictor_forward.1} parent=1 // pred_region
      %71 = dma.done [#allocation8], 2048
    $region37: #{grid_predictor_forward.1} parent=1 // pred_fallthru
      _
    %72 = sfence
    %v74 = vld [vmem:[%s1] sm:$0x3]
    %v75 = vpack.c.bf16 %v74, %v74
    %v76 = vld [vmem:[#allocation6] sm:$0xff]
    %v77 = vld [vmem:[#allocation6 + $0x8] sm:$0xff]
    %v78 = vld [vmem:[#allocation6 + $0x1c] sm:$0xff]
    %v79 = vld [vmem:[#allocation6 + $0x24] sm:$0xff]
    %v80 = vld [vmem:[#allocation6 + $0x38] sm:$0xff]
    %v81 = vld [vmem:[#allocation6 + $0x40] sm:$0xff]
    %v82 = vld [vmem:[#allocation6 + $0x54] sm:$0xff]
    %v83 = vld [vmem:[#allocation6 + $0x5c] sm:$0xff]
    %v84 = vld [vmem:[#allocation6 + $0x70] sm:$0xff]
    %v85 = vld [vmem:[#allocation6 + $0x78] sm:$0xff]
    %v86 = vld [vmem:[#allocation6 + $0x8c] sm:$0xff]
    %v87 = vld [vmem:[#allocation6 + $0x94] sm:$0xff]
    %v88 = vld [vmem:[#allocation6 + $0xa8] sm:$0xff]
    %v89 = vld [vmem:[#allocation6 + $0xb0] sm:$0xff]
    %v90 = vld [vmem:[#allocation6 + $0xc4] sm:$0xff]
    %v91 = vld [vmem:[#allocation6 + $0xcc] sm:$0xff]
    %v92 = vld [vmem:[#allocation9] ss:$8 sm:$0xf]
    %v94 = vlaneseq
    %v95 = vshrl.u32 %v94, 7
    %v96 = vsub.s32 0, %v95
    %v97 = vrot.slane %v92, %v96
    %v98 = vlaneseq
    %v99 = vshrl.u32 %v98, 7
    %v100 = vsub.s32 1, %v99
    %v101 = vrot.slane %v92, %v100
    %v102 = vlaneseq
    %v103 = vshrl.u32 %v102, 7
    %v104 = vsub.s32 2, %v103
    %v105 = vrot.slane %v92, %v104
    %v106 = vlaneseq
    %v107 = vshrl.u32 %v106, 7
    %v108 = vsub.s32 3, %v107
    %v109 = vrot.slane %v92, %v108
    %v130 = vunpack.c.l.b16 %v76
    %v131 = vunpack.c.h.b16 %v76
    %v132 = vunpack.c.l.b16 %v77
    %v133 = vunpack.c.h.b16 %v77
    %v134 = vunpack.c.l.b16 %v78
    %v135 = vunpack.c.h.b16 %v78
    %v136 = vunpack.c.l.b16 %v79
    %v137 = vunpack.c.h.b16 %v79
    %v138 = vunpack.c.l.b16 %v80
    %v139 = vunpack.c.h.b16 %v80
    %v140 = vunpack.c.l.b16 %v81
    %v141 = vunpack.c.h.b16 %v81
    %v142 = vunpack.c.l.b16 %v82
    %v143 = vunpack.c.h.b16 %v82
    %v144 = vunpack.c.l.b16 %v83
    %v145 = vunpack.c.h.b16 %v83
    %v146 = vunpack.c.l.b16 %v84
    %v147 = vunpack.c.h.b16 %v84
    %v148 = vunpack.c.l.b16 %v85
    %v149 = vunpack.c.h.b16 %v85
    %v150 = vunpack.c.l.b16 %v86
    %v151 = vunpack.c.h.b16 %v86
    %v152 = vunpack.c.l.b16 %v87
    %v153 = vunpack.c.h.b16 %v87
    %v154 = vunpack.c.l.b16 %v88
    %v155 = vunpack.c.h.b16 %v88
    %v156 = vunpack.c.l.b16 %v89
    %v157 = vunpack.c.h.b16 %v89
    %v158 = vunpack.c.l.b16 %v90
    %v159 = vunpack.c.h.b16 %v90
    %v160 = vunpack.c.l.b16 %v91
    %v161 = vunpack.c.h.b16 %v91
    %v162 = vpack.c.b16 %v134, %v130
    %v163 = vpack.c.b16 %v135, %v131
    %v164 = vpack.c.b16 %v136, %v132
    %v165 = vpack.c.b16 %v137, %v133
    %v166 = vpack.c.b16 %v142, %v138
    %v167 = vpack.c.b16 %v143, %v139
    %v168 = vpack.c.b16 %v144, %v140
    %v169 = vpack.c.b16 %v145, %v141
    %v170 = vpack.c.b16 %v150, %v146
    %v171 = vpack.c.b16 %v151, %v147
    %v172 = vpack.c.b16 %v152, %v148
    %v173 = vpack.c.b16 %v153, %v149
    %v174 = vpack.c.b16 %v158, %v154
    %v175 = vpack.c.b16 %v159, %v155
    %v176 = vpack.c.b16 %v160, %v156
    %v177 = vpack.c.b16 %v161, %v157
    %vm194 = vcmask 523264
    %v196 = vsel %vm194, %v75, 0
    %198 = vmatprep.subr.bf16.mxu0 0
    %199 = vmatpush1.bf16.msra.mxu0 0
    %200 = vmatprep.subr.bf16.mxu0 0
    %201 = vmatpush1.bf16.msra.mxu0 0
    %202 = vmatprep.subr.bf16.mxu0 0
    %203 = vmatpush1.bf16.msra.mxu0 0
    %204 = vmatprep.subr.bf16.mxu0 0
    %205 = vmatpush1.bf16.msra.mxu0 0
    %206 = vmatprep.subr.bf16.mxu0 %v175
    %207 = vmatpush1.bf16.msra.mxu0 %v174
    %208 = vmatprep.subr.bf16.mxu0 %v171
    %209 = vmatpush1.bf16.msra.mxu0 %v170
    %210 = vmatprep.subr.bf16.mxu0 %v167
    %211 = vmatpush1.bf16.msra.mxu0 %v166
    %212 = vmatprep.subr.bf16.mxu0 %v163
    %213 = vmatpush1.bf16.msra.mxu0 %v162
    %214 = vmatprep.subr.bf16.mxu0 0
    %215 = vmatpush2.bf16.msra.mxu0 0
    %216 = vmatprep.subr.bf16.mxu0 0
    %217 = vmatpush2.bf16.msra.mxu0 0
    %218 = vmatprep.subr.bf16.mxu0 0
    %219 = vmatpush2.bf16.msra.mxu0 0
    %220 = vmatprep.subr.bf16.mxu0 0
    %221 = vmatpush2.bf16.msra.mxu0 0
    %222 = vmatprep.subr.bf16.mxu0 0
    %223 = vmatpush2.bf16.msra.mxu0 0
    %224 = vmatprep.subr.bf16.mxu0 0
    %225 = vmatpush2.bf16.msra.mxu0 0
    %226 = vmatprep.subr.bf16.mxu0 0
    %227 = vmatpush2.bf16.msra.mxu0 0
    %228 = vmatprep.subr.bf16.mxu0 0
    %229 = vmatpush2.bf16.msra.mxu0 0
    %230 = vmatprep.mubr.bf16.mxu0 0
    %231 = vmatmul.mubr.bf16.gmra.mxu0 %v196
    %v232 = vpop.f32.mrf.mxu0
    %v233 = vadd.f32 %v97, %v232
    %v234 = vpop.f32.mrf.mxu0
    %v235 = vadd.f32 %v101, %v234
    %v236 = vpop.f32.mrf.mxu0
    %v237 = vpop.f32.mrf.mxu0
    %238 = vdwg.mxu0
    %239 = vmatprep.subr.bf16.mxu0 0
    %240 = vmatpush1.bf16.msra.mxu0 0
    %241 = vmatprep.subr.bf16.mxu0 0
    %242 = vmatpush1.bf16.msra.mxu0 0
    %243 = vmatprep.subr.bf16.mxu0 0
    %244 = vmatpush1.bf16.msra.mxu0 0
    %245 = vmatprep.subr.bf16.mxu0 0
    %246 = vmatpush1.bf16.msra.mxu0 0
    %247 = vmatprep.subr.bf16.mxu0 %v177
    %248 = vmatpush1.bf16.msra.mxu0 %v176
    %249 = vmatprep.subr.bf16.mxu0 %v173
    %250 = vmatpush1.bf16.msra.mxu0 %v172
    %251 = vmatprep.subr.bf16.mxu0 %v169
    %252 = vmatpush1.bf16.msra.mxu0 %v168
    %253 = vmatprep.subr.bf16.mxu0 %v165
    %254 = vmatpush1.bf16.msra.mxu0 %v164
    %255 = vmatprep.subr.bf16.mxu0 0
    %256 = vmatpush2.bf16.msra.mxu0 0
    %257 = vmatprep.subr.bf16.mxu0 0
    %258 = vmatpush2.bf16.msra.mxu0 0
    %259 = vmatprep.subr.bf16.mxu0 0
    %260 = vmatpush2.bf16.msra.mxu0 0
    %261 = vmatprep.subr.bf16.mxu0 0
    %262 = vmatpush2.bf16.msra.mxu0 0
    %263 = vmatprep.subr.bf16.mxu0 0
    %264 = vmatpush2.bf16.msra.mxu0 0
    %265 = vmatprep.subr.bf16.mxu0 0
    %266 = vmatpush2.bf16.msra.mxu0 0
    %267 = vmatprep.subr.bf16.mxu0 0
    %268 = vmatpush2.bf16.msra.mxu0 0
    %269 = vmatprep.subr.bf16.mxu0 0
    %270 = vmatpush2.bf16.msra.mxu0 0
    %271 = vmatprep.mubr.bf16.mxu0 0
    %272 = vmatmul.mubr.bf16.gmra.mxu0 %v196
    %v273 = vpop.f32.mrf.mxu0
    %v274 = vadd.f32 %v105, %v273
    %v275 = vpop.f32.mrf.mxu0
    %v276 = vadd.f32 %v109, %v275
    %v277 = vpop.f32.mrf.mxu0
    %v278 = vpop.f32.mrf.mxu0
    %279 = vdwg.mxu0
    %v280 = vmax.f32 %v233, 0.0
    %v281 = vmax.f32 %v235, 0.0
    %v282 = vmax.f32 %v274, 0.0
    %v283 = vmax.f32 %v276, 0.0
    %v284 = vld [vmem:[#allocation7] sm:$0xff]
    %v285 = vld [vmem:[#allocation7 + $0x8] sm:$0xff]
    %v286 = vld [vmem:[#allocation7 + $0x10] sm:$0xff]
    %v287 = vld [vmem:[#allocation7 + $0x18] sm:$0xff]
    %v288 = vld [vmem:[#allocation7 + $0x20] sm:$0xff]
    %v289 = vld [vmem:[#allocation7 + $0x28] sm:$0xff]
    %v290 = vld [vmem:[#allocation7 + $0x30] sm:$0xff]
    %v291 = vld [vmem:[#allocation7 + $0x38] sm:$0xff]
    %v292 = vld [vmem:[#allocation7 + $0x40] sm:$0xff]
    %v293 = vld [vmem:[#allocation7 + $0x48] sm:$0xff]
    %v294 = vld [vmem:[#allocation7 + $0x50] sm:$0xff]
    %v295 = vld [vmem:[#allocation7 + $0x58] sm:$0xff]
    %v296 = vld [vmem:[#allocation7 + $0x60] sm:$0xff]
    %v297 = vld [vmem:[#allocation7 + $0x68] sm:$0xff]
    %v298 = vld [vmem:[#allocation7 + $0x70] sm:$0xff]
    %v299 = vld [vmem:[#allocation7 + $0x78] sm:$0xff]
    %v300 = vld [vmem:[#allocation7 + $0x80] sm:$0xff]
    %v301 = vld [vmem:[#allocation7 + $0x88] sm:$0xff]
    %v302 = vld [vmem:[#allocation7 + $0x90] sm:$0xff]
    %v303 = vld [vmem:[#allocation7 + $0x98] sm:$0xff]
    %v304 = vld [vmem:[#allocation7 + $0xa0] sm:$0xff]
    %v305 = vld [vmem:[#allocation7 + $0xa8] sm:$0xff]
    %v306 = vld [vmem:[#allocation7 + $0xb0] sm:$0xff]
    %v307 = vld [vmem:[#allocation7 + $0xb8] sm:$0xff]
    %v308 = vld [vmem:[#allocation7 + $0xc0] sm:$0xff]
    %v309 = vld [vmem:[#allocation7 + $0xc8] sm:$0xff]
    %v310 = vld [vmem:[#allocation7 + $0xd0] sm:$0xff]
    %v311 = vld [vmem:[#allocation7 + $0xd8] sm:$0xff]
    %v312 = vld [vmem:[#allocation7 + $0xe0] sm:$0xff]
    %v313 = vld [vmem:[#allocation7 + $0xe8] sm:$0xff]
    %v314 = vld [vmem:[#allocation7 + $0xf0] sm:$0xff]
    %v315 = vld [vmem:[#allocation7 + $0xf8] sm:$0xff]
    %v316 = vld [vmem:[#allocation7 + $0x100] sm:$0xff]
    %v317 = vld [vmem:[#allocation7 + $0x108] sm:$0xff]
    %v318 = vld [vmem:[#allocation7 + $0x110] sm:$0xff]
    %v319 = vld [vmem:[#allocation7 + $0x118] sm:$0xff]
    %v320 = vld [vmem:[#allocation7 + $0x120] sm:$0xff]
    %v321 = vld [vmem:[#allocation7 + $0x128] sm:$0xff]
    %v322 = vld [vmem:[#allocation7 + $0x130] sm:$0xff]
    %v323 = vld [vmem:[#allocation7 + $0x138] sm:$0xff]
    %v324 = vld [vmem:[#allocation7 + $0x140] sm:$0xff]
    %v325 = vld [vmem:[#allocation7 + $0x148] sm:$0xff]
    %v326 = vld [vmem:[#allocation7 + $0x150] sm:$0xff]
    %v327 = vld [vmem:[#allocation7 + $0x158] sm:$0xff]
    %v328 = vld [vmem:[#allocation7 + $0x160] sm:$0xff]
    %v329 = vld [vmem:[#allocation7 + $0x168] sm:$0xff]
    %v330 = vld [vmem:[#allocation7 + $0x170] sm:$0xff]
    %v331 = vld [vmem:[#allocation7 + $0x178] sm:$0xff]
    %v332 = vld [vmem:[#allocation7 + $0x180] sm:$0xff]
    %v333 = vld [vmem:[#allocation7 + $0x188] sm:$0xff]
    %v334 = vld [vmem:[#allocation7 + $0x190] sm:$0xff]
    %v335 = vld [vmem:[#allocation7 + $0x198] sm:$0xff]
    %v336 = vld [vmem:[#allocation7 + $0x1a0] sm:$0xff]
    %v337 = vld [vmem:[#allocation7 + $0x1a8] sm:$0xff]
    %v338 = vld [vmem:[#allocation7 + $0x1b0] sm:$0xff]
    %v339 = vld [vmem:[#allocation7 + $0x1b8] sm:$0xff]
    %v340 = vld [vmem:[#allocation7 + $0x1c0] sm:$0xff]
    %v341 = vld [vmem:[#allocation7 + $0x1c8] sm:$0xff]
    %v342 = vld [vmem:[#allocation7 + $0x1d0] sm:$0xff]
    %v343 = vld [vmem:[#allocation7 + $0x1d8] sm:$0xff]
    %v344 = vld [vmem:[#allocation7 + $0x1e0] sm:$0xff]
    %v345 = vld [vmem:[#allocation7 + $0x1e8] sm:$0xff]
    %v346 = vld [vmem:[#allocation7 + $0x1f0] sm:$0xff]
    %v347 = vld [vmem:[#allocation7 + $0x1f8] sm:$0xff]
    %v348 = vld [vmem:[#allocation7 + $0x200] sm:$0xff]
    %v349 = vld [vmem:[#allocation7 + $0x208] sm:$0xff]
    %v350 = vld [vmem:[#allocation7 + $0x210] sm:$0xff]
    %v351 = vld [vmem:[#allocation7 + $0x218] sm:$0xff]
    %v352 = vld [vmem:[#allocation7 + $0x220] sm:$0xff]
    %v353 = vld [vmem:[#allocation7 + $0x228] sm:$0xff]
    %v354 = vld [vmem:[#allocation7 + $0x230] sm:$0xff]
    %v355 = vld [vmem:[#allocation7 + $0x238] sm:$0xff]
    %v356 = vld [vmem:[#allocation7 + $0x240] sm:$0xff]
    %v357 = vld [vmem:[#allocation7 + $0x248] sm:$0xff]
    %v358 = vld [vmem:[#allocation7 + $0x250] sm:$0xff]
    %v359 = vld [vmem:[#allocation7 + $0x258] sm:$0xff]
    %v360 = vld [vmem:[#allocation7 + $0x260] sm:$0xff]
    %v361 = vld [vmem:[#allocation7 + $0x268] sm:$0xff]
    %v362 = vld [vmem:[#allocation7 + $0x270] sm:$0xff]
    %v363 = vld [vmem:[#allocation7 + $0x278] sm:$0xff]
    %v364 = vld [vmem:[#allocation7 + $0x280] sm:$0xff]
    %v365 = vld [vmem:[#allocation7 + $0x288] sm:$0xff]
    %v366 = vld [vmem:[#allocation7 + $0x290] sm:$0xff]
    %v367 = vld [vmem:[#allocation7 + $0x298] sm:$0xff]
    %v368 = vld [vmem:[#allocation7 + $0x2a0] sm:$0xff]
    %v369 = vld [vmem:[#allocation7 + $0x2a8] sm:$0xff]
    %v370 = vld [vmem:[#allocation7 + $0x2b0] sm:$0xff]
    %v371 = vld [vmem:[#allocation7 + $0x2b8] sm:$0xff]
    %v372 = vld [vmem:[#allocation7 + $0x2c0] sm:$0xff]
    %v373 = vld [vmem:[#allocation7 + $0x2c8] sm:$0xff]
    %v374 = vld [vmem:[#allocation7 + $0x2d0] sm:$0xff]
    %v375 = vld [vmem:[#allocation7 + $0x2d8] sm:$0xff]
    %v376 = vld [vmem:[#allocation7 + $0x2e0] sm:$0xff]
    %v377 = vld [vmem:[#allocation7 + $0x2e8] sm:$0xff]
    %v378 = vld [vmem:[#allocation7 + $0x2f0] sm:$0xff]
    %v379 = vld [vmem:[#allocation7 + $0x2f8] sm:$0xff]
    %v380 = vld [vmem:[#allocation7 + $0x300] sm:$0xff]
    %v381 = vld [vmem:[#allocation7 + $0x308] sm:$0xff]
    %v382 = vld [vmem:[#allocation7 + $0x310] sm:$0xff]
    %v383 = vld [vmem:[#allocation7 + $0x318] sm:$0xff]
    %v384 = vld [vmem:[#allocation7 + $0x320] sm:$0xff]
    %v385 = vld [vmem:[#allocation7 + $0x328] sm:$0xff]
    %v386 = vld [vmem:[#allocation7 + $0x330] sm:$0xff]
    %v387 = vld [vmem:[#allocation7 + $0x338] sm:$0xff]
    %v388 = vld [vmem:[#allocation7 + $0x340] sm:$0xff]
    %v389 = vld [vmem:[#allocation7 + $0x348] sm:$0xff]
    %v390 = vld [vmem:[#allocation7 + $0x350] sm:$0xff]
    %v391 = vld [vmem:[#allocation7 + $0x358] sm:$0xff]
    %v392 = vld [vmem:[#allocation7 + $0x360] sm:$0xff]
    %v393 = vld [vmem:[#allocation7 + $0x368] sm:$0xff]
    %v394 = vld [vmem:[#allocation7 + $0x370] sm:$0xff]
    %v395 = vld [vmem:[#allocation7 + $0x378] sm:$0xff]
    %v396 = vld [vmem:[#allocation7 + $0x380] sm:$0xff]
    %v397 = vld [vmem:[#allocation7 + $0x388] sm:$0xff]
    %v398 = vld [vmem:[#allocation7 + $0x390] sm:$0xff]
    %v399 = vld [vmem:[#allocation7 + $0x398] sm:$0xff]
    %v400 = vld [vmem:[#allocation7 + $0x3a0] sm:$0xff]
    %v401 = vld [vmem:[#allocation7 + $0x3a8] sm:$0xff]
    %v402 = vld [vmem:[#allocation7 + $0x3b0] sm:$0xff]
    %v403 = vld [vmem:[#allocation7 + $0x3b8] sm:$0xff]
    %v404 = vld [vmem:[#allocation7 + $0x3c0] sm:$0xff]
    %v405 = vld [vmem:[#allocation7 + $0x3c8] sm:$0xff]
    %v406 = vld [vmem:[#allocation7 + $0x3d0] sm:$0xff]
    %v407 = vld [vmem:[#allocation7 + $0x3d8] sm:$0xff]
    %v408 = vld [vmem:[#allocation7 + $0x3e0] sm:$0xff]
    %v409 = vld [vmem:[#allocation7 + $0x3e8] sm:$0xff]
    %v410 = vld [vmem:[#allocation7 + $0x3f0] sm:$0xff]
    %v411 = vld [vmem:[#allocation7 + $0x3f8] sm:$0xff]
    %v412 = vld [vmem:[#allocation7 + $0x400] sm:$0xff]
    %v413 = vld [vmem:[#allocation7 + $0x408] sm:$0xff]
    %v414 = vld [vmem:[#allocation7 + $0x410] sm:$0xff]
    %v415 = vld [vmem:[#allocation7 + $0x418] sm:$0xff]
    %v416 = vld [vmem:[#allocation7 + $0x420] sm:$0xff]
    %v417 = vld [vmem:[#allocation7 + $0x428] sm:$0xff]
    %v418 = vld [vmem:[#allocation7 + $0x430] sm:$0xff]
    %v419 = vld [vmem:[#allocation7 + $0x438] sm:$0xff]
    %v420 = vld [vmem:[#allocation7 + $0x440] sm:$0xff]
    %v421 = vld [vmem:[#allocation7 + $0x448] sm:$0xff]
    %v422 = vld [vmem:[#allocation7 + $0x450] sm:$0xff]
    %v423 = vld [vmem:[#allocation7 + $0x458] sm:$0xff]
    %v424 = vld [vmem:[#allocation7 + $0x460] sm:$0xff]
    %v425 = vld [vmem:[#allocation7 + $0x468] sm:$0xff]
    %v426 = vld [vmem:[#allocation7 + $0x470] sm:$0xff]
    %v427 = vld [vmem:[#allocation7 + $0x478] sm:$0xff]
    %v428 = vld [vmem:[#allocation7 + $0x480] sm:$0xff]
    %v429 = vld [vmem:[#allocation7 + $0x488] sm:$0xff]
    %v430 = vld [vmem:[#allocation7 + $0x490] sm:$0xff]
    %v431 = vld [vmem:[#allocation7 + $0x498] sm:$0xff]
    %v432 = vld [vmem:[#allocation7 + $0x4a0] sm:$0xff]
    %v433 = vld [vmem:[#allocation7 + $0x4a8] sm:$0xff]
    %v434 = vld [vmem:[#allocation7 + $0x4b0] sm:$0xff]
    %v435 = vld [vmem:[#allocation7 + $0x4b8] sm:$0xff]
    %v436 = vld [vmem:[#allocation7 + $0x4c0] sm:$0xff]
    %v437 = vld [vmem:[#allocation7 + $0x4c8] sm:$0xff]
    %v438 = vld [vmem:[#allocation7 + $0x4d0] sm:$0xff]
    %v439 = vld [vmem:[#allocation7 + $0x4d8] sm:$0xff]
    %v440 = vld [vmem:[#allocation7 + $0x4e0] sm:$0xff]
    %v441 = vld [vmem:[#allocation7 + $0x4e8] sm:$0xff]
    %v442 = vld [vmem:[#allocation7 + $0x4f0] sm:$0xff]
    %v443 = vld [vmem:[#allocation7 + $0x4f8] sm:$0xff]
    %v444 = vld [vmem:[#allocation7 + $0x500] sm:$0xff]
    %v445 = vld [vmem:[#allocation7 + $0x508] sm:$0xff]
    %v446 = vld [vmem:[#allocation7 + $0x510] sm:$0xff]
    %v447 = vld [vmem:[#allocation7 + $0x518] sm:$0xff]
    %v448 = vld [vmem:[#allocation7 + $0x520] sm:$0xff]
    %v449 = vld [vmem:[#allocation7 + $0x528] sm:$0xff]
    %v450 = vld [vmem:[#allocation7 + $0x530] sm:$0xff]
    %v451 = vld [vmem:[#allocation7 + $0x538] sm:$0xff]
    %v452 = vld [vmem:[#allocation7 + $0x540] sm:$0xff]
    %v453 = vld [vmem:[#allocation7 + $0x548] sm:$0xff]
    %v454 = vld [vmem:[#allocation7 + $0x550] sm:$0xff]
    %v455 = vld [vmem:[#allocation7 + $0x558] sm:$0xff]
    %v456 = vld [vmem:[#allocation7 + $0x560] sm:$0xff]
    %v457 = vld [vmem:[#allocation7 + $0x568] sm:$0xff]
    %v458 = vld [vmem:[#allocation7 + $0x570] sm:$0xff]
    %v459 = vld [vmem:[#allocation7 + $0x578] sm:$0xff]
    %v460 = vld [vmem:[#allocation7 + $0x580] sm:$0xff]
    %v461 = vld [vmem:[#allocation7 + $0x588] sm:$0xff]
    %v462 = vld [vmem:[#allocation7 + $0x590] sm:$0xff]
    %v463 = vld [vmem:[#allocation7 + $0x598] sm:$0xff]
    %v464 = vld [vmem:[#allocation7 + $0x5a0] sm:$0xff]
    %v465 = vld [vmem:[#allocation7 + $0x5a8] sm:$0xff]
    %v466 = vld [vmem:[#allocation7 + $0x5b0] sm:$0xff]
    %v467 = vld [vmem:[#allocation7 + $0x5b8] sm:$0xff]
    %v468 = vld [vmem:[#allocation7 + $0x5c0] sm:$0xff]
    %v469 = vld [vmem:[#allocation7 + $0x5c8] sm:$0xff]
    %v470 = vld [vmem:[#allocation7 + $0x5d0] sm:$0xff]
    %v471 = vld [vmem:[#allocation7 + $0x5d8] sm:$0xff]
    %v472 = vld [vmem:[#allocation7 + $0x5e0] sm:$0xff]
    %v473 = vld [vmem:[#allocation7 + $0x5e8] sm:$0xff]
    %v474 = vld [vmem:[#allocation7 + $0x5f0] sm:$0xff]
    %v475 = vld [vmem:[#allocation7 + $0x5f8] sm:$0xff]
    %v476 = vld [vmem:[#allocation7 + $0x600] sm:$0xff]
    %v477 = vld [vmem:[#allocation7 + $0x608] sm:$0xff]
    %v478 = vld [vmem:[#allocation7 + $0x610] sm:$0xff]
    %v479 = vld [vmem:[#allocation7 + $0x618] sm:$0xff]
    %v480 = vld [vmem:[#allocation7 + $0x620] sm:$0xff]
    %v481 = vld [vmem:[#allocation7 + $0x628] sm:$0xff]
    %v482 = vld [vmem:[#allocation7 + $0x630] sm:$0xff]
    %v483 = vld [vmem:[#allocation7 + $0x638] sm:$0xff]
    %v484 = vld [vmem:[#allocation7 + $0x640] sm:$0xff]
    %v485 = vld [vmem:[#allocation7 + $0x648] sm:$0xff]
    %v486 = vld [vmem:[#allocation7 + $0x650] sm:$0xff]
    %v487 = vld [vmem:[#allocation7 + $0x658] sm:$0xff]
    %v488 = vld [vmem:[#allocation7 + $0x660] sm:$0xff]
    %v489 = vld [vmem:[#allocation7 + $0x668] sm:$0xff]
    %v490 = vld [vmem:[#allocation7 + $0x670] sm:$0xff]
    %v491 = vld [vmem:[#allocation7 + $0x678] sm:$0xff]
    %v492 = vld [vmem:[#allocation7 + $0x680] sm:$0xff]
    %v493 = vld [vmem:[#allocation7 + $0x688] sm:$0xff]
    %v494 = vld [vmem:[#allocation7 + $0x690] sm:$0xff]
    %v495 = vld [vmem:[#allocation7 + $0x698] sm:$0xff]
    %v496 = vld [vmem:[#allocation7 + $0x6a0] sm:$0xff]
    %v497 = vld [vmem:[#allocation7 + $0x6a8] sm:$0xff]
    %v498 = vld [vmem:[#allocation7 + $0x6b0] sm:$0xff]
    %v499 = vld [vmem:[#allocation7 + $0x6b8] sm:$0xff]
    %v500 = vld [vmem:[#allocation7 + $0x6c0] sm:$0xff]
    %v501 = vld [vmem:[#allocation7 + $0x6c8] sm:$0xff]
    %v502 = vld [vmem:[#allocation7 + $0x6d0] sm:$0xff]
    %v503 = vld [vmem:[#allocation7 + $0x6d8] sm:$0xff]
    %v504 = vld [vmem:[#allocation7 + $0x6e0] sm:$0xff]
    %v505 = vld [vmem:[#allocation7 + $0x6e8] sm:$0xff]
    %v506 = vld [vmem:[#allocation7 + $0x6f0] sm:$0xff]
    %v507 = vld [vmem:[#allocation7 + $0x6f8] sm:$0xff]
    %v508 = vld [vmem:[#allocation7 + $0x700] sm:$0xff]
    %v509 = vld [vmem:[#allocation7 + $0x708] sm:$0xff]
    %v510 = vld [vmem:[#allocation7 + $0x710] sm:$0xff]
    %v511 = vld [vmem:[#allocation7 + $0x718] sm:$0xff]
    %v512 = vld [vmem:[#allocation7 + $0x720] sm:$0xff]
    %v513 = vld [vmem:[#allocation7 + $0x728] sm:$0xff]
    %v514 = vld [vmem:[#allocation7 + $0x730] sm:$0xff]
    %v515 = vld [vmem:[#allocation7 + $0x738] sm:$0xff]
    %v516 = vld [vmem:[#allocation7 + $0x740] sm:$0xff]
    %v517 = vld [vmem:[#allocation7 + $0x748] sm:$0xff]
    %v518 = vld [vmem:[#allocation7 + $0x750] sm:$0xff]
    %v519 = vld [vmem:[#allocation7 + $0x758] sm:$0xff]
    %v520 = vld [vmem:[#allocation7 + $0x760] sm:$0xff]
    %v521 = vld [vmem:[#allocation7 + $0x768] sm:$0xff]
    %v522 = vld [vmem:[#allocation7 + $0x770] sm:$0xff]
    %v523 = vld [vmem:[#allocation7 + $0x778] sm:$0xff]
    %v524 = vld [vmem:[#allocation7 + $0x780] sm:$0xff]
    %v525 = vld [vmem:[#allocation7 + $0x788] sm:$0xff]
    %v526 = vld [vmem:[#allocation7 + $0x790] sm:$0xff]
    %v527 = vld [vmem:[#allocation7 + $0x798] sm:$0xff]
    %v528 = vld [vmem:[#allocation7 + $0x7a0] sm:$0xff]
    %v529 = vld [vmem:[#allocation7 + $0x7a8] sm:$0xff]
    %v530 = vld [vmem:[#allocation7 + $0x7b0] sm:$0xff]
    %v531 = vld [vmem:[#allocation7 + $0x7b8] sm:$0xff]
    %v532 = vld [vmem:[#allocation7 + $0x7c0] sm:$0xff]
    %v533 = vld [vmem:[#allocation7 + $0x7c8] sm:$0xff]
    %v534 = vld [vmem:[#allocation7 + $0x7d0] sm:$0xff]
    %v535 = vld [vmem:[#allocation7 + $0x7d8] sm:$0xff]
    %v536 = vld [vmem:[#allocation7 + $0x7e0] sm:$0xff]
    %v537 = vld [vmem:[#allocation7 + $0x7e8] sm:$0xff]
    %v538 = vld [vmem:[#allocation7 + $0x7f0] sm:$0xff]
    %v539 = vld [vmem:[#allocation7 + $0x7f8] sm:$0xff]
    %v540 = vpack.c.bf16 %v280, %v280
    %v541 = vpack.c.bf16 %v281, %v281
    %v542 = vpack.c.bf16 %v282, %v282
    %v543 = vpack.c.bf16 %v283, %v283
    %s544 = scalar_lea.vmem [#allocation9], 1
    %v545 = vld [vmem:[%s544] ss:$8 sm:$0xf]
    %v546 = vld [vmem:[%s544] ss:$8 sm:$0xf0]
    %v547 = vor.u32 %v545, %v546
    %v549 = vlaneseq
    %v550 = vshrl.u32 %v549, 7
    %v551 = vsub.s32 0, %v550
    %v552 = vrot.slane %v547, %v551
    %v553 = vlaneseq
    %v554 = vshrl.u32 %v553, 7
    %v555 = vsub.s32 1, %v554
    %v556 = vrot.slane %v547, %v555
    %v557 = vlaneseq
    %v558 = vshrl.u32 %v557, 7
    %v559 = vsub.s32 2, %v558
    %v560 = vrot.slane %v547, %v559
    %v561 = vlaneseq
    %v562 = vshrl.u32 %v561, 7
    %v563 = vsub.s32 3, %v562
    %v564 = vrot.slane %v547, %v563
    %v565 = vlaneseq
    %v566 = vshrl.u32 %v565, 7
    %v567 = vsub.s32 4, %v566
    %v568 = vrot.slane %v547, %v567
    %v569 = vlaneseq
    %v570 = vshrl.u32 %v569, 7
    %v571 = vsub.s32 5, %v570
    %v572 = vrot.slane %v547, %v571
    %v573 = vlaneseq
    %v574 = vshrl.u32 %v573, 7
    %v575 = vsub.s32 6, %v574
    %v576 = vrot.slane %v547, %v575
    %v577 = vlaneseq
    %v578 = vshrl.u32 %v577, 7
    %v579 = vsub.s32 7, %v578
    %v580 = vrot.slane %v547, %v579
    %v845 = vunpack.c.l.b16 %v284
    %v846 = vunpack.c.h.b16 %v284
    %v847 = vunpack.c.l.b16 %v285
    %v848 = vunpack.c.h.b16 %v285
    %v849 = vunpack.c.l.b16 %v286
    %v850 = vunpack.c.h.b16 %v286
    %v851 = vunpack.c.l.b16 %v287
    %v852 = vunpack.c.h.b16 %v287
    %v853 = vunpack.c.l.b16 %v288
    %v854 = vunpack.c.h.b16 %v288
    %v855 = vunpack.c.l.b16 %v289
    %v856 = vunpack.c.h.b16 %v289
    %v857 = vunpack.c.l.b16 %v290
    %v858 = vunpack.c.h.b16 %v290
    %v859 = vunpack.c.l.b16 %v291
    %v860 = vunpack.c.h.b16 %v291
    %v861 = vunpack.c.l.b16 %v292
    %v862 = vunpack.c.h.b16 %v292
    %v863 = vunpack.c.l.b16 %v293
    %v864 = vunpack.c.h.b16 %v293
    %v865 = vunpack.c.l.b16 %v294
    %v866 = vunpack.c.h.b16 %v294
    %v867 = vunpack.c.l.b16 %v295
    %v868 = vunpack.c.h.b16 %v295
    %v869 = vunpack.c.l.b16 %v296
    %v870 = vunpack.c.h.b16 %v296
    %v871 = vunpack.c.l.b16 %v297
    %v872 = vunpack.c.h.b16 %v297
    %v873 = vunpack.c.l.b16 %v298
    %v874 = vunpack.c.h.b16 %v298
    %v875 = vunpack.c.l.b16 %v299
    %v876 = vunpack.c.h.b16 %v299
    %v877 = vunpack.c.l.b16 %v300
    %v878 = vunpack.c.h.b16 %v300
    %v879 = vunpack.c.l.b16 %v301
    %v880 = vunpack.c.h.b16 %v301
    %v881 = vunpack.c.l.b16 %v302
    %v882 = vunpack.c.h.b16 %v302
    %v883 = vunpack.c.l.b16 %v303
    %v884 = vunpack.c.h.b16 %v303
    %v885 = vunpack.c.l.b16 %v304
    %v886 = vunpack.c.h.b16 %v304
    %v887 = vunpack.c.l.b16 %v305
    %v888 = vunpack.c.h.b16 %v305
    %v889 = vunpack.c.l.b16 %v306
    %v890 = vunpack.c.h.b16 %v306
    %v891 = vunpack.c.l.b16 %v307
    %v892 = vunpack.c.h.b16 %v307
    %v893 = vunpack.c.l.b16 %v308
    %v894 = vunpack.c.h.b16 %v308
    %v895 = vunpack.c.l.b16 %v309
    %v896 = vunpack.c.h.b16 %v309
    %v897 = vunpack.c.l.b16 %v310
    %v898 = vunpack.c.h.b16 %v310
    %v899 = vunpack.c.l.b16 %v311
    %v900 = vunpack.c.h.b16 %v311
    %v901 = vunpack.c.l.b16 %v312
    %v902 = vunpack.c.h.b16 %v312
    %v903 = vunpack.c.l.b16 %v313
    %v904 = vunpack.c.h.b16 %v313
    %v905 = vunpack.c.l.b16 %v314
    %v906 = vunpack.c.h.b16 %v314
    %v907 = vunpack.c.l.b16 %v315
    %v908 = vunpack.c.h.b16 %v315
    %v909 = vunpack.c.l.b16 %v316
    %v910 = vunpack.c.h.b16 %v316
    %v911 = vunpack.c.l.b16 %v317
    %v912 = vunpack.c.h.b16 %v317
    %v913 = vunpack.c.l.b16 %v318
    %v914 = vunpack.c.h.b16 %v318
    %v915 = vunpack.c.l.b16 %v319
    %v916 = vunpack.c.h.b16 %v319
    %v917 = vunpack.c.l.b16 %v320
    %v918 = vunpack.c.h.b16 %v320
    %v919 = vunpack.c.l.b16 %v321
    %v920 = vunpack.c.h.b16 %v321
    %v921 = vunpack.c.l.b16 %v322
    %v922 = vunpack.c.h.b16 %v322
    %v923 = vunpack.c.l.b16 %v323
    %v924 = vunpack.c.h.b16 %v323
    %v925 = vunpack.c.l.b16 %v324
    %v926 = vunpack.c.h.b16 %v324
    %v927 = vunpack.c.l.b16 %v325
    %v928 = vunpack.c.h.b16 %v325
    %v929 = vunpack.c.l.b16 %v326
    %v930 = vunpack.c.h.b16 %v326
    %v931 = vunpack.c.l.b16 %v327
    %v932 = vunpack.c.h.b16 %v327
    %v933 = vunpack.c.l.b16 %v328
    %v934 = vunpack.c.h.b16 %v328
    %v935 = vunpack.c.l.b16 %v329
    %v936 = vunpack.c.h.b16 %v329
    %v937 = vunpack.c.l.b16 %v330
    %v938 = vunpack.c.h.b16 %v330
    %v939 = vunpack.c.l.b16 %v331
    %v940 = vunpack.c.h.b16 %v331
    %v941 = vunpack.c.l.b16 %v332
    %v942 = vunpack.c.h.b16 %v332
    %v943 = vunpack.c.l.b16 %v333
    %v944 = vunpack.c.h.b16 %v333
    %v945 = vunpack.c.l.b16 %v334
    %v946 = vunpack.c.h.b16 %v334
    %v947 = vunpack.c.l.b16 %v335
    %v948 = vunpack.c.h.b16 %v335
    %v949 = vunpack.c.l.b16 %v336
    %v950 = vunpack.c.h.b16 %v336
    %v951 = vunpack.c.l.b16 %v337
    %v952 = vunpack.c.h.b16 %v337
    %v953 = vunpack.c.l.b16 %v338
    %v954 = vunpack.c.h.b16 %v338
    %v955 = vunpack.c.l.b16 %v339
    %v956 = vunpack.c.h.b16 %v339
    %v957 = vunpack.c.l.b16 %v340
    %v958 = vunpack.c.h.b16 %v340
    %v959 = vunpack.c.l.b16 %v341
    %v960 = vunpack.c.h.b16 %v341
    %v961 = vunpack.c.l.b16 %v342
    %v962 = vunpack.c.h.b16 %v342
    %v963 = vunpack.c.l.b16 %v343
    %v964 = vunpack.c.h.b16 %v343
    %v965 = vunpack.c.l.b16 %v344
    %v966 = vunpack.c.h.b16 %v344
    %v967 = vunpack.c.l.b16 %v345
    %v968 = vunpack.c.h.b16 %v345
    %v969 = vunpack.c.l.b16 %v346
    %v970 = vunpack.c.h.b16 %v346
    %v971 = vunpack.c.l.b16 %v347
    %v972 = vunpack.c.h.b16 %v347
    %v973 = vunpack.c.l.b16 %v348
    %v974 = vunpack.c.h.b16 %v348
    %v975 = vunpack.c.l.b16 %v349
    %v976 = vunpack.c.h.b16 %v349
    %v977 = vunpack.c.l.b16 %v350
    %v978 = vunpack.c.h.b16 %v350
    %v979 = vunpack.c.l.b16 %v351
    %v980 = vunpack.c.h.b16 %v351
    %v981 = vunpack.c.l.b16 %v352
    %v982 = vunpack.c.h.b16 %v352
    %v983 = vunpack.c.l.b16 %v353
    %v984 = vunpack.c.h.b16 %v353
    %v985 = vunpack.c.l.b16 %v354
    %v986 = vunpack.c.h.b16 %v354
    %v987 = vunpack.c.l.b16 %v355
    %v988 = vunpack.c.h.b16 %v355
    %v989 = vunpack.c.l.b16 %v356
    %v990 = vunpack.c.h.b16 %v356
    %v991 = vunpack.c.l.b16 %v357
    %v992 = vunpack.c.h.b16 %v357
    %v993 = vunpack.c.l.b16 %v358
    %v994 = vunpack.c.h.b16 %v358
    %v995 = vunpack.c.l.b16 %v359
    %v996 = vunpack.c.h.b16 %v359
    %v997 = vunpack.c.l.b16 %v360
    %v998 = vunpack.c.h.b16 %v360
    %v999 = vunpack.c.l.b16 %v361
    %v1000 = vunpack.c.h.b16 %v361
    %v1001 = vunpack.c.l.b16 %v362
    %v1002 = vunpack.c.h.b16 %v362
    %v1003 = vunpack.c.l.b16 %v363
    %v1004 = vunpack.c.h.b16 %v363
    %v1005 = vunpack.c.l.b16 %v364
    %v1006 = vunpack.c.h.b16 %v364
    %v1007 = vunpack.c.l.b16 %v365
    %v1008 = vunpack.c.h.b16 %v365
    %v1009 = vunpack.c.l.b16 %v366
    %v1010 = vunpack.c.h.b16 %v366
    %v1011 = vunpack.c.l.b16 %v367
    %v1012 = vunpack.c.h.b16 %v367
    %v1013 = vunpack.c.l.b16 %v368
    %v1014 = vunpack.c.h.b16 %v368
    %v1015 = vunpack.c.l.b16 %v369
    %v1016 = vunpack.c.h.b16 %v369
    %v1017 = vunpack.c.l.b16 %v370
    %v1018 = vunpack.c.h.b16 %v370
    %v1019 = vunpack.c.l.b16 %v371
    %v1020 = vunpack.c.h.b16 %v371
    %v1021 = vunpack.c.l.b16 %v372
    %v1022 = vunpack.c.h.b16 %v372
    %v1023 = vunpack.c.l.b16 %v373
    %v1024 = vunpack.c.h.b16 %v373
    %v1025 = vunpack.c.l.b16 %v374
    %v1026 = vunpack.c.h.b16 %v374
    %v1027 = vunpack.c.l.b16 %v375
    %v1028 = vunpack.c.h.b16 %v375
    %v1029 = vunpack.c.l.b16 %v376
    %v1030 = vunpack.c.h.b16 %v376
    %v1031 = vunpack.c.l.b16 %v377
    %v1032 = vunpack.c.h.b16 %v377
    %v1033 = vunpack.c.l.b16 %v378
    %v1034 = vunpack.c.h.b16 %v378
    %v1035 = vunpack.c.l.b16 %v379
    %v1036 = vunpack.c.h.b16 %v379
    %v1037 = vunpack.c.l.b16 %v380
    %v1038 = vunpack.c.h.b16 %v380
    %v1039 = vunpack.c.l.b16 %v381
    %v1040 = vunpack.c.h.b16 %v381
    %v1041 = vunpack.c.l.b16 %v382
    %v1042 = vunpack.c.h.b16 %v382
    %v1043 = vunpack.c.l.b16 %v383
    %v1044 = vunpack.c.h.b16 %v383
    %v1045 = vunpack.c.l.b16 %v384
    %v1046 = vunpack.c.h.b16 %v384
    %v1047 = vunpack.c.l.b16 %v385
    %v1048 = vunpack.c.h.b16 %v385
    %v1049 = vunpack.c.l.b16 %v386
    %v1050 = vunpack.c.h.b16 %v386
    %v1051 = vunpack.c.l.b16 %v387
    %v1052 = vunpack.c.h.b16 %v387
    %v1053 = vunpack.c.l.b16 %v388
    %v1054 = vunpack.c.h.b16 %v388
    %v1055 = vunpack.c.l.b16 %v389
    %v1056 = vunpack.c.h.b16 %v389
    %v1057 = vunpack.c.l.b16 %v390
    %v1058 = vunpack.c.h.b16 %v390
    %v1059 = vunpack.c.l.b16 %v391
    %v1060 = vunpack.c.h.b16 %v391
    %v1061 = vunpack.c.l.b16 %v392
    %v1062 = vunpack.c.h.b16 %v392
    %v1063 = vunpack.c.l.b16 %v393
    %v1064 = vunpack.c.h.b16 %v393
    %v1065 = vunpack.c.l.b16 %v394
    %v1066 = vunpack.c.h.b16 %v394
    %v1067 = vunpack.c.l.b16 %v395
    %v1068 = vunpack.c.h.b16 %v395
    %v1069 = vunpack.c.l.b16 %v396
    %v1070 = vunpack.c.h.b16 %v396
    %v1071 = vunpack.c.l.b16 %v397
    %v1072 = vunpack.c.h.b16 %v397
    %v1073 = vunpack.c.l.b16 %v398
    %v1074 = vunpack.c.h.b16 %v398
    %v1075 = vunpack.c.l.b16 %v399
    %v1076 = vunpack.c.h.b16 %v399
    %v1077 = vunpack.c.l.b16 %v400
    %v1078 = vunpack.c.h.b16 %v400
    %v1079 = vunpack.c.l.b16 %v401
    %v1080 = vunpack.c.h.b16 %v401
    %v1081 = vunpack.c.l.b16 %v402
    %v1082 = vunpack.c.h.b16 %v402
    %v1083 = vunpack.c.l.b16 %v403
    %v1084 = vunpack.c.h.b16 %v403
    %v1085 = vunpack.c.l.b16 %v404
    %v1086 = vunpack.c.h.b16 %v404
    %v1087 = vunpack.c.l.b16 %v405
    %v1088 = vunpack.c.h.b16 %v405
    %v1089 = vunpack.c.l.b16 %v406
    %v1090 = vunpack.c.h.b16 %v406
    %v1091 = vunpack.c.l.b16 %v407
    %v1092 = vunpack.c.h.b16 %v407
    %v1093 = vunpack.c.l.b16 %v408
    %v1094 = vunpack.c.h.b16 %v408
    %v1095 = vunpack.c.l.b16 %v409
    %v1096 = vunpack.c.h.b16 %v409
    %v1097 = vunpack.c.l.b16 %v410
    %v1098 = vunpack.c.h.b16 %v410
    %v1099 = vunpack.c.l.b16 %v411
    %v1100 = vunpack.c.h.b16 %v411
    %v1101 = vunpack.c.l.b16 %v412
    %v1102 = vunpack.c.h.b16 %v412
    %v1103 = vunpack.c.l.b16 %v413
    %v1104 = vunpack.c.h.b16 %v413
    %v1105 = vunpack.c.l.b16 %v414
    %v1106 = vunpack.c.h.b16 %v414
    %v1107 = vunpack.c.l.b16 %v415
    %v1108 = vunpack.c.h.b16 %v415
    %v1109 = vunpack.c.l.b16 %v416
    %v1110 = vunpack.c.h.b16 %v416
    %v1111 = vunpack.c.l.b16 %v417
    %v1112 = vunpack.c.h.b16 %v417
    %v1113 = vunpack.c.l.b16 %v418
    %v1114 = vunpack.c.h.b16 %v418
    %v1115 = vunpack.c.l.b16 %v419
    %v1116 = vunpack.c.h.b16 %v419
    %v1117 = vunpack.c.l.b16 %v420
    %v1118 = vunpack.c.h.b16 %v420
    %v1119 = vunpack.c.l.b16 %v421
    %v1120 = vunpack.c.h.b16 %v421
    %v1121 = vunpack.c.l.b16 %v422
    %v1122 = vunpack.c.h.b16 %v422
    %v1123 = vunpack.c.l.b16 %v423
    %v1124 = vunpack.c.h.b16 %v423
    %v1125 = vunpack.c.l.b16 %v424
    %v1126 = vunpack.c.h.b16 %v424
    %v1127 = vunpack.c.l.b16 %v425
    %v1128 = vunpack.c.h.b16 %v425
    %v1129 = vunpack.c.l.b16 %v426
    %v1130 = vunpack.c.h.b16 %v426
    %v1131 = vunpack.c.l.b16 %v427
    %v1132 = vunpack.c.h.b16 %v427
    %v1133 = vunpack.c.l.b16 %v428
    %v1134 = vunpack.c.h.b16 %v428
    %v1135 = vunpack.c.l.b16 %v429
    %v1136 = vunpack.c.h.b16 %v429
    %v1137 = vunpack.c.l.b16 %v430
    %v1138 = vunpack.c.h.b16 %v430
    %v1139 = vunpack.c.l.b16 %v431
    %v1140 = vunpack.c.h.b16 %v431
    %v1141 = vunpack.c.l.b16 %v432
    %v1142 = vunpack.c.h.b16 %v432
    %v1143 = vunpack.c.l.b16 %v433
    %v1144 = vunpack.c.h.b16 %v433
    %v1145 = vunpack.c.l.b16 %v434
    %v1146 = vunpack.c.h.b16 %v434
    %v1147 = vunpack.c.l.b16 %v435
    %v1148 = vunpack.c.h.b16 %v435
    %v1149 = vunpack.c.l.b16 %v436
    %v1150 = vunpack.c.h.b16 %v436
    %v1151 = vunpack.c.l.b16 %v437
    %v1152 = vunpack.c.h.b16 %v437
    %v1153 = vunpack.c.l.b16 %v438
    %v1154 = vunpack.c.h.b16 %v438
    %v1155 = vunpack.c.l.b16 %v439
    %v1156 = vunpack.c.h.b16 %v439
    %v1157 = vunpack.c.l.b16 %v440
    %v1158 = vunpack.c.h.b16 %v440
    %v1159 = vunpack.c.l.b16 %v441
    %v1160 = vunpack.c.h.b16 %v441
    %v1161 = vunpack.c.l.b16 %v442
    %v1162 = vunpack.c.h.b16 %v442
    %v1163 = vunpack.c.l.b16 %v443
    %v1164 = vunpack.c.h.b16 %v443
    %v1165 = vunpack.c.l.b16 %v444
    %v1166 = vunpack.c.h.b16 %v444
    %v1167 = vunpack.c.l.b16 %v445
    %v1168 = vunpack.c.h.b16 %v445
    %v1169 = vunpack.c.l.b16 %v446
    %v1170 = vunpack.c.h.b16 %v446
    %v1171 = vunpack.c.l.b16 %v447
    %v1172 = vunpack.c.h.b16 %v447
    %v1173 = vunpack.c.l.b16 %v448
    %v1174 = vunpack.c.h.b16 %v448
    %v1175 = vunpack.c.l.b16 %v449
    %v1176 = vunpack.c.h.b16 %v449
    %v1177 = vunpack.c.l.b16 %v450
    %v1178 = vunpack.c.h.b16 %v450
    %v1179 = vunpack.c.l.b16 %v451
    %v1180 = vunpack.c.h.b16 %v451
    %v1181 = vunpack.c.l.b16 %v452
    %v1182 = vunpack.c.h.b16 %v452
    %v1183 = vunpack.c.l.b16 %v453
    %v1184 = vunpack.c.h.b16 %v453
    %v1185 = vunpack.c.l.b16 %v454
    %v1186 = vunpack.c.h.b16 %v454
    %v1187 = vunpack.c.l.b16 %v455
    %v1188 = vunpack.c.h.b16 %v455
    %v1189 = vunpack.c.l.b16 %v456
    %v1190 = vunpack.c.h.b16 %v456
    %v1191 = vunpack.c.l.b16 %v457
    %v1192 = vunpack.c.h.b16 %v457
    %v1193 = vunpack.c.l.b16 %v458
    %v1194 = vunpack.c.h.b16 %v458
    %v1195 = vunpack.c.l.b16 %v459
    %v1196 = vunpack.c.h.b16 %v459
    %v1197 = vunpack.c.l.b16 %v460
    %v1198 = vunpack.c.h.b16 %v460
    %v1199 = vunpack.c.l.b16 %v461
    %v1200 = vunpack.c.h.b16 %v461
    %v1201 = vunpack.c.l.b16 %v462
    %v1202 = vunpack.c.h.b16 %v462
    %v1203 = vunpack.c.l.b16 %v463
    %v1204 = vunpack.c.h.b16 %v463
    %v1205 = vunpack.c.l.b16 %v464
    %v1206 = vunpack.c.h.b16 %v464
    %v1207 = vunpack.c.l.b16 %v465
    %v1208 = vunpack.c.h.b16 %v465
    %v1209 = vunpack.c.l.b16 %v466
    %v1210 = vunpack.c.h.b16 %v466
    %v1211 = vunpack.c.l.b16 %v467
    %v1212 = vunpack.c.h.b16 %v467
    %v1213 = vunpack.c.l.b16 %v468
    %v1214 = vunpack.c.h.b16 %v468
    %v1215 = vunpack.c.l.b16 %v469
    %v1216 = vunpack.c.h.b16 %v469
    %v1217 = vunpack.c.l.b16 %v470
    %v1218 = vunpack.c.h.b16 %v470
    %v1219 = vunpack.c.l.b16 %v471
    %v1220 = vunpack.c.h.b16 %v471
    %v1221 = vunpack.c.l.b16 %v472
    %v1222 = vunpack.c.h.b16 %v472
    %v1223 = vunpack.c.l.b16 %v473
    %v1224 = vunpack.c.h.b16 %v473
    %v1225 = vunpack.c.l.b16 %v474
    %v1226 = vunpack.c.h.b16 %v474
    %v1227 = vunpack.c.l.b16 %v475
    %v1228 = vunpack.c.h.b16 %v475
    %v1229 = vunpack.c.l.b16 %v476
    %v1230 = vunpack.c.h.b16 %v476
    %v1231 = vunpack.c.l.b16 %v477
    %v1232 = vunpack.c.h.b16 %v477
    %v1233 = vunpack.c.l.b16 %v478
    %v1234 = vunpack.c.h.b16 %v478
    %v1235 = vunpack.c.l.b16 %v479
    %v1236 = vunpack.c.h.b16 %v479
    %v1237 = vunpack.c.l.b16 %v480
    %v1238 = vunpack.c.h.b16 %v480
    %v1239 = vunpack.c.l.b16 %v481
    %v1240 = vunpack.c.h.b16 %v481
    %v1241 = vunpack.c.l.b16 %v482
    %v1242 = vunpack.c.h.b16 %v482
    %v1243 = vunpack.c.l.b16 %v483
    %v1244 = vunpack.c.h.b16 %v483
    %v1245 = vunpack.c.l.b16 %v484
    %v1246 = vunpack.c.h.b16 %v484
    %v1247 = vunpack.c.l.b16 %v485
    %v1248 = vunpack.c.h.b16 %v485
    %v1249 = vunpack.c.l.b16 %v486
    %v1250 = vunpack.c.h.b16 %v486
    %v1251 = vunpack.c.l.b16 %v487
    %v1252 = vunpack.c.h.b16 %v487
    %v1253 = vunpack.c.l.b16 %v488
    %v1254 = vunpack.c.h.b16 %v488
    %v1255 = vunpack.c.l.b16 %v489
    %v1256 = vunpack.c.h.b16 %v489
    %v1257 = vunpack.c.l.b16 %v490
    %v1258 = vunpack.c.h.b16 %v490
    %v1259 = vunpack.c.l.b16 %v491
    %v1260 = vunpack.c.h.b16 %v491
    %v1261 = vunpack.c.l.b16 %v492
    %v1262 = vunpack.c.h.b16 %v492
    %v1263 = vunpack.c.l.b16 %v493
    %v1264 = vunpack.c.h.b16 %v493
    %v1265 = vunpack.c.l.b16 %v494
    %v1266 = vunpack.c.h.b16 %v494
    %v1267 = vunpack.c.l.b16 %v495
    %v1268 = vunpack.c.h.b16 %v495
    %v1269 = vunpack.c.l.b16 %v496
    %v1270 = vunpack.c.h.b16 %v496
    %v1271 = vunpack.c.l.b16 %v497
    %v1272 = vunpack.c.h.b16 %v497
    %v1273 = vunpack.c.l.b16 %v498
    %v1274 = vunpack.c.h.b16 %v498
    %v1275 = vunpack.c.l.b16 %v499
    %v1276 = vunpack.c.h.b16 %v499
    %v1277 = vunpack.c.l.b16 %v500
    %v1278 = vunpack.c.h.b16 %v500
    %v1279 = vunpack.c.l.b16 %v501
    %v1280 = vunpack.c.h.b16 %v501
    %v1281 = vunpack.c.l.b16 %v502
    %v1282 = vunpack.c.h.b16 %v502
    %v1283 = vunpack.c.l.b16 %v503
    %v1284 = vunpack.c.h.b16 %v503
    %v1285 = vunpack.c.l.b16 %v504
    %v1286 = vunpack.c.h.b16 %v504
    %v1287 = vunpack.c.l.b16 %v505
    %v1288 = vunpack.c.h.b16 %v505
    %v1289 = vunpack.c.l.b16 %v506
    %v1290 = vunpack.c.h.b16 %v506
    %v1291 = vunpack.c.l.b16 %v507
    %v1292 = vunpack.c.h.b16 %v507
    %v1293 = vunpack.c.l.b16 %v508
    %v1294 = vunpack.c.h.b16 %v508
    %v1295 = vunpack.c.l.b16 %v509
    %v1296 = vunpack.c.h.b16 %v509
    %v1297 = vunpack.c.l.b16 %v510
    %v1298 = vunpack.c.h.b16 %v510
    %v1299 = vunpack.c.l.b16 %v511
    %v1300 = vunpack.c.h.b16 %v511
    %v1301 = vunpack.c.l.b16 %v512
    %v1302 = vunpack.c.h.b16 %v512
    %v1303 = vunpack.c.l.b16 %v513
    %v1304 = vunpack.c.h.b16 %v513
    %v1305 = vunpack.c.l.b16 %v514
    %v1306 = vunpack.c.h.b16 %v514
    %v1307 = vunpack.c.l.b16 %v515
    %v1308 = vunpack.c.h.b16 %v515
    %v1309 = vunpack.c.l.b16 %v516
    %v1310 = vunpack.c.h.b16 %v516
    %v1311 = vunpack.c.l.b16 %v517
    %v1312 = vunpack.c.h.b16 %v517
    %v1313 = vunpack.c.l.b16 %v518
    %v1314 = vunpack.c.h.b16 %v518
    %v1315 = vunpack.c.l.b16 %v519
    %v1316 = vunpack.c.h.b16 %v519
    %v1317 = vunpack.c.l.b16 %v520
    %v1318 = vunpack.c.h.b16 %v520
    %v1319 = vunpack.c.l.b16 %v521
    %v1320 = vunpack.c.h.b16 %v521
    %v1321 = vunpack.c.l.b16 %v522
    %v1322 = vunpack.c.h.b16 %v522
    %v1323 = vunpack.c.l.b16 %v523
    %v1324 = vunpack.c.h.b16 %v523
    %v1325 = vunpack.c.l.b16 %v524
    %v1326 = vunpack.c.h.b16 %v524
    %v1327 = vunpack.c.l.b16 %v525
    %v1328 = vunpack.c.h.b16 %v525
    %v1329 = vunpack.c.l.b16 %v526
    %v1330 = vunpack.c.h.b16 %v526
    %v1331 = vunpack.c.l.b16 %v527
    %v1332 = vunpack.c.h.b16 %v527
    %v1333 = vunpack.c.l.b16 %v528
    %v1334 = vunpack.c.h.b16 %v528
    %v1335 = vunpack.c.l.b16 %v529
    %v1336 = vunpack.c.h.b16 %v529
    %v1337 = vunpack.c.l.b16 %v530
    %v1338 = vunpack.c.h.b16 %v530
    %v1339 = vunpack.c.l.b16 %v531
    %v1340 = vunpack.c.h.b16 %v531
    %v1341 = vunpack.c.l.b16 %v532
    %v1342 = vunpack.c.h.b16 %v532
    %v1343 = vunpack.c.l.b16 %v533
    %v1344 = vunpack.c.h.b16 %v533
    %v1345 = vunpack.c.l.b16 %v534
    %v1346 = vunpack.c.h.b16 %v534
    %v1347 = vunpack.c.l.b16 %v535
    %v1348 = vunpack.c.h.b16 %v535
    %v1349 = vunpack.c.l.b16 %v536
    %v1350 = vunpack.c.h.b16 %v536
    %v1351 = vunpack.c.l.b16 %v537
    %v1352 = vunpack.c.h.b16 %v537
    %v1353 = vunpack.c.l.b16 %v538
    %v1354 = vunpack.c.h.b16 %v538
    %v1355 = vunpack.c.l.b16 %v539
    %v1356 = vunpack.c.h.b16 %v539
    %v1357 = vpack.c.b16 %v853, %v845
    %v1358 = vpack.c.b16 %v854, %v846
    %v1359 = vpack.c.b16 %v855, %v847
    %v1360 = vpack.c.b16 %v856, %v848
    %v1361 = vpack.c.b16 %v857, %v849
    %v1362 = vpack.c.b16 %v858, %v850
    %v1363 = vpack.c.b16 %v859, %v851
    %v1364 = vpack.c.b16 %v860, %v852
    %v1365 = vpack.c.b16 %v869, %v861
    %v1366 = vpack.c.b16 %v870, %v862
    %v1367 = vpack.c.b16 %v871, %v863
    %v1368 = vpack.c.b16 %v872, %v864
    %v1369 = vpack.c.b16 %v873, %v865
    %v1370 = vpack.c.b16 %v874, %v866
    %v1371 = vpack.c.b16 %v875, %v867
    %v1372 = vpack.c.b16 %v876, %v868
    %v1373 = vpack.c.b16 %v885, %v877
    %v1374 = vpack.c.b16 %v886, %v878
    %v1375 = vpack.c.b16 %v887, %v879
    %v1376 = vpack.c.b16 %v888, %v880
    %v1377 = vpack.c.b16 %v889, %v881
    %v1378 = vpack.c.b16 %v890, %v882
    %v1379 = vpack.c.b16 %v891, %v883
    %v1380 = vpack.c.b16 %v892, %v884
    %v1381 = vpack.c.b16 %v901, %v893
    %v1382 = vpack.c.b16 %v902, %v894
    %v1383 = vpack.c.b16 %v903, %v895
    %v1384 = vpack.c.b16 %v904, %v896
    %v1385 = vpack.c.b16 %v905, %v897
    %v1386 = vpack.c.b16 %v906, %v898
    %v1387 = vpack.c.b16 %v907, %v899
    %v1388 = vpack.c.b16 %v908, %v900
    %v1389 = vpack.c.b16 %v917, %v909
    %v1390 = vpack.c.b16 %v918, %v910
    %v1391 = vpack.c.b16 %v919, %v911
    %v1392 = vpack.c.b16 %v920, %v912
    %v1393 = vpack.c.b16 %v921, %v913
    %v1394 = vpack.c.b16 %v922, %v914
    %v1395 = vpack.c.b16 %v923, %v915
    %v1396 = vpack.c.b16 %v924, %v916
    %v1397 = vpack.c.b16 %v933, %v925
    %v1398 = vpack.c.b16 %v934, %v926
    %v1399 = vpack.c.b16 %v935, %v927
    %v1400 = vpack.c.b16 %v936, %v928
    %v1401 = vpack.c.b16 %v937, %v929
    %v1402 = vpack.c.b16 %v938, %v930
    %v1403 = vpack.c.b16 %v939, %v931
    %v1404 = vpack.c.b16 %v940, %v932
    %v1405 = vpack.c.b16 %v949, %v941
    %v1406 = vpack.c.b16 %v950, %v942
    %v1407 = vpack.c.b16 %v951, %v943
    %v1408 = vpack.c.b16 %v952, %v944
    %v1409 = vpack.c.b16 %v953, %v945
    %v1410 = vpack.c.b16 %v954, %v946
    %v1411 = vpack.c.b16 %v955, %v947
    %v1412 = vpack.c.b16 %v956, %v948
    %v1413 = vpack.c.b16 %v965, %v957
    %v1414 = vpack.c.b16 %v966, %v958
    %v1415 = vpack.c.b16 %v967, %v959
    %v1416 = vpack.c.b16 %v968, %v960
    %v1417 = vpack.c.b16 %v969, %v961
    %v1418 = vpack.c.b16 %v970, %v962
    %v1419 = vpack.c.b16 %v971, %v963
    %v1420 = vpack.c.b16 %v972, %v964
    %v1421 = vpack.c.b16 %v981, %v973
    %v1422 = vpack.c.b16 %v982, %v974
    %v1423 = vpack.c.b16 %v983, %v975
    %v1424 = vpack.c.b16 %v984, %v976
    %v1425 = vpack.c.b16 %v985, %v977
    %v1426 = vpack.c.b16 %v986, %v978
    %v1427 = vpack.c.b16 %v987, %v979
    %v1428 = vpack.c.b16 %v988, %v980
    %v1429 = vpack.c.b16 %v997, %v989
    %v1430 = vpack.c.b16 %v998, %v990
    %v1431 = vpack.c.b16 %v999, %v991
    %v1432 = vpack.c.b16 %v1000, %v992
    %v1433 = vpack.c.b16 %v1001, %v993
    %v1434 = vpack.c.b16 %v1002, %v994
    %v1435 = vpack.c.b16 %v1003, %v995
    %v1436 = vpack.c.b16 %v1004, %v996
    %v1437 = vpack.c.b16 %v1013, %v1005
    %v1438 = vpack.c.b16 %v1014, %v1006
    %v1439 = vpack.c.b16 %v1015, %v1007
    %v1440 = vpack.c.b16 %v1016, %v1008
    %v1441 = vpack.c.b16 %v1017, %v1009
    %v1442 = vpack.c.b16 %v1018, %v1010
    %v1443 = vpack.c.b16 %v1019, %v1011
    %v1444 = vpack.c.b16 %v1020, %v1012
    %v1445 = vpack.c.b16 %v1029, %v1021
    %v1446 = vpack.c.b16 %v1030, %v1022
    %v1447 = vpack.c.b16 %v1031, %v1023
    %v1448 = vpack.c.b16 %v1032, %v1024
    %v1449 = vpack.c.b16 %v1033, %v1025
    %v1450 = vpack.c.b16 %v1034, %v1026
    %v1451 = vpack.c.b16 %v1035, %v1027
    %v1452 = vpack.c.b16 %v1036, %v1028
    %v1453 = vpack.c.b16 %v1045, %v1037
    %v1454 = vpack.c.b16 %v1046, %v1038
    %v1455 = vpack.c.b16 %v1047, %v1039
    %v1456 = vpack.c.b16 %v1048, %v1040
    %v1457 = vpack.c.b16 %v1049, %v1041
    %v1458 = vpack.c.b16 %v1050, %v1042
    %v1459 = vpack.c.b16 %v1051, %v1043
    %v1460 = vpack.c.b16 %v1052, %v1044
    %v1461 = vpack.c.b16 %v1061, %v1053
    %v1462 = vpack.c.b16 %v1062, %v1054
    %v1463 = vpack.c.b16 %v1063, %v1055
    %v1464 = vpack.c.b16 %v1064, %v1056
    %v1465 = vpack.c.b16 %v1065, %v1057
    %v1466 = vpack.c.b16 %v1066, %v1058
    %v1467 = vpack.c.b16 %v1067, %v1059
    %v1468 = vpack.c.b16 %v1068, %v1060
    %v1469 = vpack.c.b16 %v1077, %v1069
    %v1470 = vpack.c.b16 %v1078, %v1070
    %v1471 = vpack.c.b16 %v1079, %v1071
    %v1472 = vpack.c.b16 %v1080, %v1072
    %v1473 = vpack.c.b16 %v1081, %v1073
    %v1474 = vpack.c.b16 %v1082, %v1074
    %v1475 = vpack.c.b16 %v1083, %v1075
    %v1476 = vpack.c.b16 %v1084, %v1076
    %v1477 = vpack.c.b16 %v1093, %v1085
    %v1478 = vpack.c.b16 %v1094, %v1086
    %v1479 = vpack.c.b16 %v1095, %v1087
    %v1480 = vpack.c.b16 %v1096, %v1088
    %v1481 = vpack.c.b16 %v1097, %v1089
    %v1482 = vpack.c.b16 %v1098, %v1090
    %v1483 = vpack.c.b16 %v1099, %v1091
    %v1484 = vpack.c.b16 %v1100, %v1092
    %v1485 = vpack.c.b16 %v1109, %v1101
    %v1486 = vpack.c.b16 %v1110, %v1102
    %v1487 = vpack.c.b16 %v1111, %v1103
    %v1488 = vpack.c.b16 %v1112, %v1104
    %v1489 = vpack.c.b16 %v1113, %v1105
    %v1490 = vpack.c.b16 %v1114, %v1106
    %v1491 = vpack.c.b16 %v1115, %v1107
    %v1492 = vpack.c.b16 %v1116, %v1108
    %v1493 = vpack.c.b16 %v1125, %v1117
    %v1494 = vpack.c.b16 %v1126, %v1118
    %v1495 = vpack.c.b16 %v1127, %v1119
    %v1496 = vpack.c.b16 %v1128, %v1120
    %v1497 = vpack.c.b16 %v1129, %v1121
    %v1498 = vpack.c.b16 %v1130, %v1122
    %v1499 = vpack.c.b16 %v1131, %v1123
    %v1500 = vpack.c.b16 %v1132, %v1124
    %v1501 = vpack.c.b16 %v1141, %v1133
    %v1502 = vpack.c.b16 %v1142, %v1134
    %v1503 = vpack.c.b16 %v1143, %v1135
    %v1504 = vpack.c.b16 %v1144, %v1136
    %v1505 = vpack.c.b16 %v1145, %v1137
    %v1506 = vpack.c.b16 %v1146, %v1138
    %v1507 = vpack.c.b16 %v1147, %v1139
    %v1508 = vpack.c.b16 %v1148, %v1140
    %v1509 = vpack.c.b16 %v1157, %v1149
    %v1510 = vpack.c.b16 %v1158, %v1150
    %v1511 = vpack.c.b16 %v1159, %v1151
    %v1512 = vpack.c.b16 %v1160, %v1152
    %v1513 = vpack.c.b16 %v1161, %v1153
    %v1514 = vpack.c.b16 %v1162, %v1154
    %v1515 = vpack.c.b16 %v1163, %v1155
    %v1516 = vpack.c.b16 %v1164, %v1156
    %v1517 = vpack.c.b16 %v1173, %v1165
    %v1518 = vpack.c.b16 %v1174, %v1166
    %v1519 = vpack.c.b16 %v1175, %v1167
    %v1520 = vpack.c.b16 %v1176, %v1168
    %v1521 = vpack.c.b16 %v1177, %v1169
    %v1522 = vpack.c.b16 %v1178, %v1170
    %v1523 = vpack.c.b16 %v1179, %v1171
    %v1524 = vpack.c.b16 %v1180, %v1172
    %v1525 = vpack.c.b16 %v1189, %v1181
    %v1526 = vpack.c.b16 %v1190, %v1182
    %v1527 = vpack.c.b16 %v1191, %v1183
    %v1528 = vpack.c.b16 %v1192, %v1184
    %v1529 = vpack.c.b16 %v1193, %v1185
    %v1530 = vpack.c.b16 %v1194, %v1186
    %v1531 = vpack.c.b16 %v1195, %v1187
    %v1532 = vpack.c.b16 %v1196, %v1188
    %v1533 = vpack.c.b16 %v1205, %v1197
    %v1534 = vpack.c.b16 %v1206, %v1198
    %v1535 = vpack.c.b16 %v1207, %v1199
    %v1536 = vpack.c.b16 %v1208, %v1200
    %v1537 = vpack.c.b16 %v1209, %v1201
    %v1538 = vpack.c.b16 %v1210, %v1202
    %v1539 = vpack.c.b16 %v1211, %v1203
    %v1540 = vpack.c.b16 %v1212, %v1204
    %v1541 = vpack.c.b16 %v1221, %v1213
    %v1542 = vpack.c.b16 %v1222, %v1214
    %v1543 = vpack.c.b16 %v1223, %v1215
    %v1544 = vpack.c.b16 %v1224, %v1216
    %v1545 = vpack.c.b16 %v1225, %v1217
    %v1546 = vpack.c.b16 %v1226, %v1218
    %v1547 = vpack.c.b16 %v1227, %v1219
    %v1548 = vpack.c.b16 %v1228, %v1220
    %v1549 = vpack.c.b16 %v1237, %v1229
    %v1550 = vpack.c.b16 %v1238, %v1230
    %v1551 = vpack.c.b16 %v1239, %v1231
    %v1552 = vpack.c.b16 %v1240, %v1232
    %v1553 = vpack.c.b16 %v1241, %v1233
    %v1554 = vpack.c.b16 %v1242, %v1234
    %v1555 = vpack.c.b16 %v1243, %v1235
    %v1556 = vpack.c.b16 %v1244, %v1236
    %v1557 = vpack.c.b16 %v1253, %v1245
    %v1558 = vpack.c.b16 %v1254, %v1246
    %v1559 = vpack.c.b16 %v1255, %v1247
    %v1560 = vpack.c.b16 %v1256, %v1248
    %v1561 = vpack.c.b16 %v1257, %v1249
    %v1562 = vpack.c.b16 %v1258, %v1250
    %v1563 = vpack.c.b16 %v1259, %v1251
    %v1564 = vpack.c.b16 %v1260, %v1252
    %v1565 = vpack.c.b16 %v1269, %v1261
    %v1566 = vpack.c.b16 %v1270, %v1262
    %v1567 = vpack.c.b16 %v1271, %v1263
    %v1568 = vpack.c.b16 %v1272, %v1264
    %v1569 = vpack.c.b16 %v1273, %v1265
    %v1570 = vpack.c.b16 %v1274, %v1266
    %v1571 = vpack.c.b16 %v1275, %v1267
    %v1572 = vpack.c.b16 %v1276, %v1268
    %v1573 = vpack.c.b16 %v1285, %v1277
    %v1574 = vpack.c.b16 %v1286, %v1278
    %v1575 = vpack.c.b16 %v1287, %v1279
    %v1576 = vpack.c.b16 %v1288, %v1280
    %v1577 = vpack.c.b16 %v1289, %v1281
    %v1578 = vpack.c.b16 %v1290, %v1282
    %v1579 = vpack.c.b16 %v1291, %v1283
    %v1580 = vpack.c.b16 %v1292, %v1284
    %v1581 = vpack.c.b16 %v1301, %v1293
    %v1582 = vpack.c.b16 %v1302, %v1294
    %v1583 = vpack.c.b16 %v1303, %v1295
    %v1584 = vpack.c.b16 %v1304, %v1296
    %v1585 = vpack.c.b16 %v1305, %v1297
    %v1586 = vpack.c.b16 %v1306, %v1298
    %v1587 = vpack.c.b16 %v1307, %v1299
    %v1588 = vpack.c.b16 %v1308, %v1300
    %v1589 = vpack.c.b16 %v1317, %v1309
    %v1590 = vpack.c.b16 %v1318, %v1310
    %v1591 = vpack.c.b16 %v1319, %v1311
    %v1592 = vpack.c.b16 %v1320, %v1312
    %v1593 = vpack.c.b16 %v1321, %v1313
    %v1594 = vpack.c.b16 %v1322, %v1314
    %v1595 = vpack.c.b16 %v1323, %v1315
    %v1596 = vpack.c.b16 %v1324, %v1316
    %v1597 = vpack.c.b16 %v1333, %v1325
    %v1598 = vpack.c.b16 %v1334, %v1326
    %v1599 = vpack.c.b16 %v1335, %v1327
    %v1600 = vpack.c.b16 %v1336, %v1328
    %v1601 = vpack.c.b16 %v1337, %v1329
    %v1602 = vpack.c.b16 %v1338, %v1330
    %v1603 = vpack.c.b16 %v1339, %v1331
    %v1604 = vpack.c.b16 %v1340, %v1332
    %v1605 = vpack.c.b16 %v1349, %v1341
    %v1606 = vpack.c.b16 %v1350, %v1342
    %v1607 = vpack.c.b16 %v1351, %v1343
    %v1608 = vpack.c.b16 %v1352, %v1344
    %v1609 = vpack.c.b16 %v1353, %v1345
    %v1610 = vpack.c.b16 %v1354, %v1346
    %v1611 = vpack.c.b16 %v1355, %v1347
    %v1612 = vpack.c.b16 %v1356, %v1348
    %1869 = vmatprep.subr.bf16.mxu0 %v1414
    %1870 = vmatpush1.bf16.msra.mxu0 %v1413
    %1871 = vmatprep.subr.bf16.mxu0 %v1406
    %1872 = vmatpush1.bf16.msra.mxu0 %v1405
    %1873 = vmatprep.subr.bf16.mxu0 %v1398
    %1874 = vmatpush1.bf16.msra.mxu0 %v1397
    %1875 = vmatprep.subr.bf16.mxu0 %v1390
    %1876 = vmatpush1.bf16.msra.mxu0 %v1389
    %1877 = vmatprep.subr.bf16.mxu0 %v1382
    %1878 = vmatpush1.bf16.msra.mxu0 %v1381
    %1879 = vmatprep.subr.bf16.mxu0 %v1374
    %1880 = vmatpush1.bf16.msra.mxu0 %v1373
    %1881 = vmatprep.subr.bf16.mxu0 %v1366
    %1882 = vmatpush1.bf16.msra.mxu0 %v1365
    %1883 = vmatprep.subr.bf16.mxu0 %v1358
    %1884 = vmatpush1.bf16.msra.mxu0 %v1357
    %1885 = vmatprep.subr.bf16.mxu0 %v1478
    %1886 = vmatpush2.bf16.msra.mxu0 %v1477
    %1887 = vmatprep.subr.bf16.mxu0 %v1470
    %1888 = vmatpush2.bf16.msra.mxu0 %v1469
    %1889 = vmatprep.subr.bf16.mxu0 %v1462
    %1890 = vmatpush2.bf16.msra.mxu0 %v1461
    %1891 = vmatprep.subr.bf16.mxu0 %v1454
    %1892 = vmatpush2.bf16.msra.mxu0 %v1453
    %1893 = vmatprep.subr.bf16.mxu0 %v1446
    %1894 = vmatpush2.bf16.msra.mxu0 %v1445
    %1895 = vmatprep.subr.bf16.mxu0 %v1438
    %1896 = vmatpush2.bf16.msra.mxu0 %v1437
    %1897 = vmatprep.subr.bf16.mxu0 %v1430
    %1898 = vmatpush2.bf16.msra.mxu0 %v1429
    %1899 = vmatprep.subr.bf16.mxu0 %v1422
    %1900 = vmatpush2.bf16.msra.mxu0 %v1421
    %1901 = vmatprep.mubr.bf16.mxu0 %v541
    %1902 = vmatmul.mubr.bf16.gmra.mxu0 %v540
    %v1903 = vpop.f32.mrf.mxu0
    %v1904 = vadd.f32 %v552, %v1903
    %v1905 = vpop.f32.mrf.mxu0
    %v1906 = vadd.f32 %v556, %v1905
    %v1907 = vpop.f32.mrf.mxu0
    %v1908 = vpop.f32.mrf.mxu0
    %1909 = vdwg.mxu0
    %1910 = vmatprep.subr.bf16.mxu0 %v1542
    %1911 = vmatpush1.bf16.msra.mxu0 %v1541
    %1912 = vmatprep.subr.bf16.mxu0 %v1534
    %1913 = vmatpush1.bf16.msra.mxu0 %v1533
    %1914 = vmatprep.subr.bf16.mxu0 %v1526
    %1915 = vmatpush1.bf16.msra.mxu0 %v1525
    %1916 = vmatprep.subr.bf16.mxu0 %v1518
    %1917 = vmatpush1.bf16.msra.mxu0 %v1517
    %1918 = vmatprep.subr.bf16.mxu0 %v1510
    %1919 = vmatpush1.bf16.msra.mxu0 %v1509
    %1920 = vmatprep.subr.bf16.mxu0 %v1502
    %1921 = vmatpush1.bf16.msra.mxu0 %v1501
    %1922 = vmatprep.subr.bf16.mxu0 %v1494
    %1923 = vmatpush1.bf16.msra.mxu0 %v1493
    %1924 = vmatprep.subr.bf16.mxu0 %v1486
    %1925 = vmatpush1.bf16.msra.mxu0 %v1485
    %1926 = vmatprep.subr.bf16.mxu0 %v1606
    %1927 = vmatpush2.bf16.msra.mxu0 %v1605
    %1928 = vmatprep.subr.bf16.mxu0 %v1598
    %1929 = vmatpush2.bf16.msra.mxu0 %v1597
    %1930 = vmatprep.subr.bf16.mxu0 %v1590
    %1931 = vmatpush2.bf16.msra.mxu0 %v1589
    %1932 = vmatprep.subr.bf16.mxu0 %v1582
    %1933 = vmatpush2.bf16.msra.mxu0 %v1581
    %1934 = vmatprep.subr.bf16.mxu0 %v1574
    %1935 = vmatpush2.bf16.msra.mxu0 %v1573
    %1936 = vmatprep.subr.bf16.mxu0 %v1566
    %1937 = vmatpush2.bf16.msra.mxu0 %v1565
    %1938 = vmatprep.subr.bf16.mxu0 %v1558
    %1939 = vmatpush2.bf16.msra.mxu0 %v1557
    %1940 = vmatprep.subr.bf16.mxu0 %v1550
    %1941 = vmatpush2.bf16.msra.mxu0 %v1549
    %1942 = vmatprep.mubr.bf16.mxu0 %v543
    %1943 = vmatmul.mubr.bf16.gmra.mxu0 %v542
    %v1944 = vpop.f32.mrf.mxu0
    %v1945 = vadd.f32 %v1904, %v1944
    %v1946 = vpop.f32.mrf.mxu0
    %v1947 = vadd.f32 %v1906, %v1946
    %v1948 = vpop.f32.mrf.mxu0
    %v1949 = vpop.f32.mrf.mxu0
    %1950 = vdwg.mxu0
    %1951 = vmatprep.subr.bf16.mxu0 %v1416
    %1952 = vmatpush1.bf16.msra.mxu0 %v1415
    %1953 = vmatprep.subr.bf16.mxu0 %v1408
    %1954 = vmatpush1.bf16.msra.mxu0 %v1407
    %1955 = vmatprep.subr.bf16.mxu0 %v1400
    %1956 = vmatpush1.bf16.msra.mxu0 %v1399
    %1957 = vmatprep.subr.bf16.mxu0 %v1392
    %1958 = vmatpush1.bf16.msra.mxu0 %v1391
    %1959 = vmatprep.subr.bf16.mxu0 %v1384
    %1960 = vmatpush1.bf16.msra.mxu0 %v1383
    %1961 = vmatprep.subr.bf16.mxu0 %v1376
    %1962 = vmatpush1.bf16.msra.mxu0 %v1375
    %1963 = vmatprep.subr.bf16.mxu0 %v1368
    %1964 = vmatpush1.bf16.msra.mxu0 %v1367
    %1965 = vmatprep.subr.bf16.mxu0 %v1360
    %1966 = vmatpush1.bf16.msra.mxu0 %v1359
    %1967 = vmatprep.subr.bf16.mxu0 %v1480
    %1968 = vmatpush2.bf16.msra.mxu0 %v1479
    %1969 = vmatprep.subr.bf16.mxu0 %v1472
    %1970 = vmatpush2.bf16.msra.mxu0 %v1471
    %1971 = vmatprep.subr.bf16.mxu0 %v1464
    %1972 = vmatpush2.bf16.msra.mxu0 %v1463
    %1973 = vmatprep.subr.bf16.mxu0 %v1456
    %1974 = vmatpush2.bf16.msra.mxu0 %v1455
    %1975 = vmatprep.subr.bf16.mxu0 %v1448
    %1976 = vmatpush2.bf16.msra.mxu0 %v1447
    %1977 = vmatprep.subr.bf16.mxu0 %v1440
    %1978 = vmatpush2.bf16.msra.mxu0 %v1439
    %1979 = vmatprep.subr.bf16.mxu0 %v1432
    %1980 = vmatpush2.bf16.msra.mxu0 %v1431
    %1981 = vmatprep.subr.bf16.mxu0 %v1424
    %1982 = vmatpush2.bf16.msra.mxu0 %v1423
    %1983 = vmatprep.mubr.bf16.mxu0 %v541
    %1984 = vmatmul.mubr.bf16.gmra.mxu0 %v540
    %v1985 = vpop.f32.mrf.mxu0
    %v1986 = vadd.f32 %v560, %v1985
    %v1987 = vpop.f32.mrf.mxu0
    %v1988 = vadd.f32 %v564, %v1987
    %v1989 = vpop.f32.mrf.mxu0
    %v1990 = vpop.f32.mrf.mxu0
    %1991 = vdwg.mxu0
    %1992 = vmatprep.subr.bf16.mxu0 %v1544
    %1993 = vmatpush1.bf16.msra.mxu0 %v1543
    %1994 = vmatprep.subr.bf16.mxu0 %v1536
    %1995 = vmatpush1.bf16.msra.mxu0 %v1535
    %1996 = vmatprep.subr.bf16.mxu0 %v1528
    %1997 = vmatpush1.bf16.msra.mxu0 %v1527
    %1998 = vmatprep.subr.bf16.mxu0 %v1520
    %1999 = vmatpush1.bf16.msra.mxu0 %v1519
    %2000 = vmatprep.subr.bf16.mxu0 %v1512
    %2001 = vmatpush1.bf16.msra.mxu0 %v1511
    %2002 = vmatprep.subr.bf16.mxu0 %v1504
    %2003 = vmatpush1.bf16.msra.mxu0 %v1503
    %2004 = vmatprep.subr.bf16.mxu0 %v1496
    %2005 = vmatpush1.bf16.msra.mxu0 %v1495
    %2006 = vmatprep.subr.bf16.mxu0 %v1488
    %2007 = vmatpush1.bf16.msra.mxu0 %v1487
    %2008 = vmatprep.subr.bf16.mxu0 %v1608
    %2009 = vmatpush2.bf16.msra.mxu0 %v1607
    %2010 = vmatprep.subr.bf16.mxu0 %v1600
    %2011 = vmatpush2.bf16.msra.mxu0 %v1599
    %2012 = vmatprep.subr.bf16.mxu0 %v1592
    %2013 = vmatpush2.bf16.msra.mxu0 %v1591
    %2014 = vmatprep.subr.bf16.mxu0 %v1584
    %2015 = vmatpush2.bf16.msra.mxu0 %v1583
    %2016 = vmatprep.subr.bf16.mxu0 %v1576
    %2017 = vmatpush2.bf16.msra.mxu0 %v1575
    %2018 = vmatprep.subr.bf16.mxu0 %v1568
    %2019 = vmatpush2.bf16.msra.mxu0 %v1567
    %2020 = vmatprep.subr.bf16.mxu0 %v1560
    %2021 = vmatpush2.bf16.msra.mxu0 %v1559
    %2022 = vmatprep.subr.bf16.mxu0 %v1552
    %2023 = vmatpush2.bf16.msra.mxu0 %v1551
    %2024 = vmatprep.mubr.bf16.mxu0 %v543
    %2025 = vmatmul.mubr.bf16.gmra.mxu0 %v542
    %v2026 = vpop.f32.mrf.mxu0
    %v2027 = vadd.f32 %v1986, %v2026
    %v2028 = vpop.f32.mrf.mxu0
    %v2029 = vadd.f32 %v1988, %v2028
    %v2030 = vpop.f32.mrf.mxu0
    %v2031 = vpop.f32.mrf.mxu0
    %2032 = vdwg.mxu0
    %2033 = vmatprep.subr.bf16.mxu0 %v1418
    %2034 = vmatpush1.bf16.msra.mxu0 %v1417
    %2035 = vmatprep.subr.bf16.mxu0 %v1410
    %2036 = vmatpush1.bf16.msra.mxu0 %v1409
    %2037 = vmatprep.subr.bf16.mxu0 %v1402
    %2038 = vmatpush1.bf16.msra.mxu0 %v1401
    %2039 = vmatprep.subr.bf16.mxu0 %v1394
    %2040 = vmatpush1.bf16.msra.mxu0 %v1393
    %2041 = vmatprep.subr.bf16.mxu0 %v1386
    %2042 = vmatpush1.bf16.msra.mxu0 %v1385
    %2043 = vmatprep.subr.bf16.mxu0 %v1378
    %2044 = vmatpush1.bf16.msra.mxu0 %v1377
    %2045 = vmatprep.subr.bf16.mxu0 %v1370
    %2046 = vmatpush1.bf16.msra.mxu0 %v1369
    %2047 = vmatprep.subr.bf16.mxu0 %v1362
    %2048 = vmatpush1.bf16.msra.mxu0 %v1361
    %2049 = vmatprep.subr.bf16.mxu0 %v1482
    %2050 = vmatpush2.bf16.msra.mxu0 %v1481
    %2051 = vmatprep.subr.bf16.mxu0 %v1474
    %2052 = vmatpush2.bf16.msra.mxu0 %v1473
    %2053 = vmatprep.subr.bf16.mxu0 %v1466
    %2054 = vmatpush2.bf16.msra.mxu0 %v1465
    %2055 = vmatprep.subr.bf16.mxu0 %v1458
    %2056 = vmatpush2.bf16.msra.mxu0 %v1457
    %2057 = vmatprep.subr.bf16.mxu0 %v1450
    %2058 = vmatpush2.bf16.msra.mxu0 %v1449
    %2059 = vmatprep.subr.bf16.mxu0 %v1442
    %2060 = vmatpush2.bf16.msra.mxu0 %v1441
    %2061 = vmatprep.subr.bf16.mxu0 %v1434
    %2062 = vmatpush2.bf16.msra.mxu0 %v1433
    %2063 = vmatprep.subr.bf16.mxu0 %v1426
    %2064 = vmatpush2.bf16.msra.mxu0 %v1425
    %2065 = vmatprep.mubr.bf16.mxu0 %v541
    %2066 = vmatmul.mubr.bf16.gmra.mxu0 %v540
    %v2067 = vpop.f32.mrf.mxu0
    %v2068 = vadd.f32 %v568, %v2067
    %v2069 = vpop.f32.mrf.mxu0
    %v2070 = vadd.f32 %v572, %v2069
    %v2071 = vpop.f32.mrf.mxu0
    %v2072 = vpop.f32.mrf.mxu0
    %2073 = vdwg.mxu0
    %2074 = vmatprep.subr.bf16.mxu0 %v1546
    %2075 = vmatpush1.bf16.msra.mxu0 %v1545
    %2076 = vmatprep.subr.bf16.mxu0 %v1538
    %2077 = vmatpush1.bf16.msra.mxu0 %v1537
    %2078 = vmatprep.subr.bf16.mxu0 %v1530
    %2079 = vmatpush1.bf16.msra.mxu0 %v1529
    %2080 = vmatprep.subr.bf16.mxu0 %v1522
    %2081 = vmatpush1.bf16.msra.mxu0 %v1521
    %2082 = vmatprep.subr.bf16.mxu0 %v1514
    %2083 = vmatpush1.bf16.msra.mxu0 %v1513
    %2084 = vmatprep.subr.bf16.mxu0 %v1506
    %2085 = vmatpush1.bf16.msra.mxu0 %v1505
    %2086 = vmatprep.subr.bf16.mxu0 %v1498
    %2087 = vmatpush1.bf16.msra.mxu0 %v1497
    %2088 = vmatprep.subr.bf16.mxu0 %v1490
    %2089 = vmatpush1.bf16.msra.mxu0 %v1489
    %2090 = vmatprep.subr.bf16.mxu0 %v1610
    %2091 = vmatpush2.bf16.msra.mxu0 %v1609
    %2092 = vmatprep.subr.bf16.mxu0 %v1602
    %2093 = vmatpush2.bf16.msra.mxu0 %v1601
    %2094 = vmatprep.subr.bf16.mxu0 %v1594
    %2095 = vmatpush2.bf16.msra.mxu0 %v1593
    %2096 = vmatprep.subr.bf16.mxu0 %v1586
    %2097 = vmatpush2.bf16.msra.mxu0 %v1585
    %2098 = vmatprep.subr.bf16.mxu0 %v1578
    %2099 = vmatpush2.bf16.msra.mxu0 %v1577
    %2100 = vmatprep.subr.bf16.mxu0 %v1570
    %2101 = vmatpush2.bf16.msra.mxu0 %v1569
    %2102 = vmatprep.subr.bf16.mxu0 %v1562
    %2103 = vmatpush2.bf16.msra.mxu0 %v1561
    %2104 = vmatprep.subr.bf16.mxu0 %v1554
    %2105 = vmatpush2.bf16.msra.mxu0 %v1553
    %2106 = vmatprep.mubr.bf16.mxu0 %v543
    %2107 = vmatmul.mubr.bf16.gmra.mxu0 %v542
    %v2108 = vpop.f32.mrf.mxu0
    %v2109 = vadd.f32 %v2068, %v2108
    %v2110 = vpop.f32.mrf.mxu0
    %v2111 = vadd.f32 %v2070, %v2110
    %v2112 = vpop.f32.mrf.mxu0
    %v2113 = vpop.f32.mrf.mxu0
    %2114 = vdwg.mxu0
    %2115 = vmatprep.subr.bf16.mxu0 %v1420
    %2116 = vmatpush1.bf16.msra.mxu0 %v1419
    %2117 = vmatprep.subr.bf16.mxu0 %v1412
    %2118 = vmatpush1.bf16.msra.mxu0 %v1411
    %2119 = vmatprep.subr.bf16.mxu0 %v1404
    %2120 = vmatpush1.bf16.msra.mxu0 %v1403
    %2121 = vmatprep.subr.bf16.mxu0 %v1396
    %2122 = vmatpush1.bf16.msra.mxu0 %v1395
    %2123 = vmatprep.subr.bf16.mxu0 %v1388
    %2124 = vmatpush1.bf16.msra.mxu0 %v1387
    %2125 = vmatprep.subr.bf16.mxu0 %v1380
    %2126 = vmatpush1.bf16.msra.mxu0 %v1379
    %2127 = vmatprep.subr.bf16.mxu0 %v1372
    %2128 = vmatpush1.bf16.msra.mxu0 %v1371
    %2129 = vmatprep.subr.bf16.mxu0 %v1364
    %2130 = vmatpush1.bf16.msra.mxu0 %v1363
    %2131 = vmatprep.subr.bf16.mxu0 %v1484
    %2132 = vmatpush2.bf16.msra.mxu0 %v1483
    %2133 = vmatprep.subr.bf16.mxu0 %v1476
    %2134 = vmatpush2.bf16.msra.mxu0 %v1475
    %2135 = vmatprep.subr.bf16.mxu0 %v1468
    %2136 = vmatpush2.bf16.msra.mxu0 %v1467
    %2137 = vmatprep.subr.bf16.mxu0 %v1460
    %2138 = vmatpush2.bf16.msra.mxu0 %v1459
    %2139 = vmatprep.subr.bf16.mxu0 %v1452
    %2140 = vmatpush2.bf16.msra.mxu0 %v1451
    %2141 = vmatprep.subr.bf16.mxu0 %v1444
    %2142 = vmatpush2.bf16.msra.mxu0 %v1443
    %2143 = vmatprep.subr.bf16.mxu0 %v1436
    %2144 = vmatpush2.bf16.msra.mxu0 %v1435
    %2145 = vmatprep.subr.bf16.mxu0 %v1428
    %2146 = vmatpush2.bf16.msra.mxu0 %v1427
    %2147 = vmatprep.mubr.bf16.mxu0 %v541
    %2148 = vmatmul.mubr.bf16.gmra.mxu0 %v540
    %v2149 = vpop.f32.mrf.mxu0
    %v2150 = vadd.f32 %v576, %v2149
    %v2151 = vpop.f32.mrf.mxu0
    %v2152 = vadd.f32 %v580, %v2151
    %v2153 = vpop.f32.mrf.mxu0
    %v2154 = vpop.f32.mrf.mxu0
    %2155 = vdwg.mxu0
    %2156 = vmatprep.subr.bf16.mxu0 %v1548
    %2157 = vmatpush1.bf16.msra.mxu0 %v1547
    %2158 = vmatprep.subr.bf16.mxu0 %v1540
    %2159 = vmatpush1.bf16.msra.mxu0 %v1539
    %2160 = vmatprep.subr.bf16.mxu0 %v1532
    %2161 = vmatpush1.bf16.msra.mxu0 %v1531
    %2162 = vmatprep.subr.bf16.mxu0 %v1524
    %2163 = vmatpush1.bf16.msra.mxu0 %v1523
    %2164 = vmatprep.subr.bf16.mxu0 %v1516
    %2165 = vmatpush1.bf16.msra.mxu0 %v1515
    %2166 = vmatprep.subr.bf16.mxu0 %v1508
    %2167 = vmatpush1.bf16.msra.mxu0 %v1507
    %2168 = vmatprep.subr.bf16.mxu0 %v1500
    %2169 = vmatpush1.bf16.msra.mxu0 %v1499
    %2170 = vmatprep.subr.bf16.mxu0 %v1492
    %2171 = vmatpush1.bf16.msra.mxu0 %v1491
    %2172 = vmatprep.subr.bf16.mxu0 %v1612
    %2173 = vmatpush2.bf16.msra.mxu0 %v1611
    %2174 = vmatprep.subr.bf16.mxu0 %v1604
    %2175 = vmatpush2.bf16.msra.mxu0 %v1603
    %2176 = vmatprep.subr.bf16.mxu0 %v1596
    %2177 = vmatpush2.bf16.msra.mxu0 %v1595
    %2178 = vmatprep.subr.bf16.mxu0 %v1588
    %2179 = vmatpush2.bf16.msra.mxu0 %v1587
    %2180 = vmatprep.subr.bf16.mxu0 %v1580
    %2181 = vmatpush2.bf16.msra.mxu0 %v1579
    %2182 = vmatprep.subr.bf16.mxu0 %v1572
    %2183 = vmatpush2.bf16.msra.mxu0 %v1571
    %2184 = vmatprep.subr.bf16.mxu0 %v1564
    %2185 = vmatpush2.bf16.msra.mxu0 %v1563
    %2186 = vmatprep.subr.bf16.mxu0 %v1556
    %2187 = vmatpush2.bf16.msra.mxu0 %v1555
    %2188 = vmatprep.mubr.bf16.mxu0 %v543
    %2189 = vmatmul.mubr.bf16.gmra.mxu0 %v542
    %v2190 = vpop.f32.mrf.mxu0
    %v2191 = vadd.f32 %v2150, %v2190
    %v2192 = vpop.f32.mrf.mxu0
    %v2193 = vadd.f32 %v2152, %v2192
    %v2194 = vpop.f32.mrf.mxu0
    %v2195 = vpop.f32.mrf.mxu0
    %2196 = vdwg.mxu0
    %v2197 = vmax.f32 %v1945, 0.0
    %v2198 = vmax.f32 %v1947, 0.0
    %v2199 = vmax.f32 %v2027, 0.0
    %v2200 = vmax.f32 %v2029, 0.0
    %v2201 = vmax.f32 %v2109, 0.0
    %v2202 = vmax.f32 %v2111, 0.0
    %v2203 = vmax.f32 %v2191, 0.0
    %v2204 = vmax.f32 %v2193, 0.0
    %v2205 = vld [vmem:[#allocation7 + $0x800] sm:$0xff]
    %v2206 = vld [vmem:[#allocation7 + $0x808] sm:$0xff]
    %v2207 = vld [vmem:[#allocation7 + $0x810] sm:$0xff]
    %v2208 = vld [vmem:[#allocation7 + $0x818] sm:$0xff]
    %v2209 = vld [vmem:[#allocation7 + $0x820] sm:$0xff]
    %v2210 = vld [vmem:[#allocation7 + $0x828] sm:$0xff]
    %v2211 = vld [vmem:[#allocation7 + $0x830] sm:$0xff]
    %v2212 = vld [vmem:[#allocation7 + $0x838] sm:$0xff]
    %v2213 = vld [vmem:[#allocation7 + $0x840] sm:$0xff]
    %v2214 = vld [vmem:[#allocation7 + $0x848] sm:$0xff]
    %v2215 = vld [vmem:[#allocation7 + $0x850] sm:$0xff]
    %v2216 = vld [vmem:[#allocation7 + $0x858] sm:$0xff]
    %v2217 = vld [vmem:[#allocation7 + $0x860] sm:$0xff]
    %v2218 = vld [vmem:[#allocation7 + $0x868] sm:$0xff]
    %v2219 = vld [vmem:[#allocation7 + $0x870] sm:$0xff]
    %v2220 = vld [vmem:[#allocation7 + $0x878] sm:$0xff]
    %v2221 = vld [vmem:[#allocation7 + $0x880] sm:$0xff]
    %v2222 = vld [vmem:[#allocation7 + $0x888] sm:$0xff]
    %v2223 = vld [vmem:[#allocation7 + $0x890] sm:$0xff]
    %v2224 = vld [vmem:[#allocation7 + $0x898] sm:$0xff]
    %v2225 = vld [vmem:[#allocation7 + $0x8a0] sm:$0xff]
    %v2226 = vld [vmem:[#allocation7 + $0x8a8] sm:$0xff]
    %v2227 = vld [vmem:[#allocation7 + $0x8b0] sm:$0xff]
    %v2228 = vld [vmem:[#allocation7 + $0x8b8] sm:$0xff]
    %v2229 = vld [vmem:[#allocation7 + $0x8c0] sm:$0xff]
    %v2230 = vld [vmem:[#allocation7 + $0x8c8] sm:$0xff]
    %v2231 = vld [vmem:[#allocation7 + $0x8d0] sm:$0xff]
    %v2232 = vld [vmem:[#allocation7 + $0x8d8] sm:$0xff]
    %v2233 = vld [vmem:[#allocation7 + $0x8e0] sm:$0xff]
    %v2234 = vld [vmem:[#allocation7 + $0x8e8] sm:$0xff]
    %v2235 = vld [vmem:[#allocation7 + $0x8f0] sm:$0xff]
    %v2236 = vld [vmem:[#allocation7 + $0x8f8] sm:$0xff]
    %v2237 = vpack.c.bf16 %v2197, %v2197
    %v2238 = vpack.c.bf16 %v2198, %v2198
    %v2239 = vpack.c.bf16 %v2199, %v2199
    %v2240 = vpack.c.bf16 %v2200, %v2200
    %v2241 = vpack.c.bf16 %v2201, %v2201
    %v2242 = vpack.c.bf16 %v2202, %v2202
    %v2243 = vpack.c.bf16 %v2203, %v2203
    %v2244 = vpack.c.bf16 %v2204, %v2204
    %v2245 = vld [vmem:[#allocation9 + $0x2] ss:$0 sm:$0xff]
    %v2278 = vunpack.c.l.b16 %v2205
    %v2279 = vunpack.c.h.b16 %v2205
    %v2280 = vunpack.c.l.b16 %v2206
    %v2281 = vunpack.c.h.b16 %v2206
    %v2282 = vunpack.c.l.b16 %v2207
    %v2283 = vunpack.c.h.b16 %v2207
    %v2284 = vunpack.c.l.b16 %v2208
    %v2285 = vunpack.c.h.b16 %v2208
    %v2286 = vunpack.c.l.b16 %v2209
    %v2287 = vunpack.c.h.b16 %v2209
    %v2288 = vunpack.c.l.b16 %v2210
    %v2289 = vunpack.c.h.b16 %v2210
    %v2290 = vunpack.c.l.b16 %v2211
    %v2291 = vunpack.c.h.b16 %v2211
    %v2292 = vunpack.c.l.b16 %v2212
    %v2293 = vunpack.c.h.b16 %v2212
    %v2294 = vunpack.c.l.b16 %v2213
    %v2295 = vunpack.c.h.b16 %v2213
    %v2296 = vunpack.c.l.b16 %v2214
    %v2297 = vunpack.c.h.b16 %v2214
    %v2298 = vunpack.c.l.b16 %v2215
    %v2299 = vunpack.c.h.b16 %v2215
    %v2300 = vunpack.c.l.b16 %v2216
    %v2301 = vunpack.c.h.b16 %v2216
    %v2302 = vunpack.c.l.b16 %v2217
    %v2303 = vunpack.c.h.b16 %v2217
    %v2304 = vunpack.c.l.b16 %v2218
    %v2305 = vunpack.c.h.b16 %v2218
    %v2306 = vunpack.c.l.b16 %v2219
    %v2307 = vunpack.c.h.b16 %v2219
    %v2308 = vunpack.c.l.b16 %v2220
    %v2309 = vunpack.c.h.b16 %v2220
    %v2310 = vunpack.c.l.b16 %v2221
    %v2311 = vunpack.c.h.b16 %v2221
    %v2312 = vunpack.c.l.b16 %v2222
    %v2313 = vunpack.c.h.b16 %v2222
    %v2314 = vunpack.c.l.b16 %v2223
    %v2315 = vunpack.c.h.b16 %v2223
    %v2316 = vunpack.c.l.b16 %v2224
    %v2317 = vunpack.c.h.b16 %v2224
    %v2318 = vunpack.c.l.b16 %v2225
    %v2319 = vunpack.c.h.b16 %v2225
    %v2320 = vunpack.c.l.b16 %v2226
    %v2321 = vunpack.c.h.b16 %v2226
    %v2322 = vunpack.c.l.b16 %v2227
    %v2323 = vunpack.c.h.b16 %v2227
    %v2324 = vunpack.c.l.b16 %v2228
    %v2325 = vunpack.c.h.b16 %v2228
    %v2326 = vunpack.c.l.b16 %v2229
    %v2327 = vunpack.c.h.b16 %v2229
    %v2328 = vunpack.c.l.b16 %v2230
    %v2329 = vunpack.c.h.b16 %v2230
    %v2330 = vunpack.c.l.b16 %v2231
    %v2331 = vunpack.c.h.b16 %v2231
    %v2332 = vunpack.c.l.b16 %v2232
    %v2333 = vunpack.c.h.b16 %v2232
    %v2334 = vunpack.c.l.b16 %v2233
    %v2335 = vunpack.c.h.b16 %v2233
    %v2336 = vunpack.c.l.b16 %v2234
    %v2337 = vunpack.c.h.b16 %v2234
    %v2338 = vunpack.c.l.b16 %v2235
    %v2339 = vunpack.c.h.b16 %v2235
    %v2340 = vunpack.c.l.b16 %v2236
    %v2341 = vunpack.c.h.b16 %v2236
    %v2342 = vpack.c.b16 %v2286, %v2278
    %v2343 = vpack.c.b16 %v2287, %v2279
    %v2344 = vpack.c.b16 %v2288, %v2280
    %v2345 = vpack.c.b16 %v2289, %v2281
    %v2346 = vpack.c.b16 %v2290, %v2282
    %v2347 = vpack.c.b16 %v2291, %v2283
    %v2348 = vpack.c.b16 %v2292, %v2284
    %v2349 = vpack.c.b16 %v2293, %v2285
    %v2350 = vpack.c.b16 %v2302, %v2294
    %v2351 = vpack.c.b16 %v2303, %v2295
    %v2352 = vpack.c.b16 %v2304, %v2296
    %v2353 = vpack.c.b16 %v2305, %v2297
    %v2354 = vpack.c.b16 %v2306, %v2298
    %v2355 = vpack.c.b16 %v2307, %v2299
    %v2356 = vpack.c.b16 %v2308, %v2300
    %v2357 = vpack.c.b16 %v2309, %v2301
    %v2358 = vpack.c.b16 %v2318, %v2310
    %v2359 = vpack.c.b16 %v2319, %v2311
    %v2360 = vpack.c.b16 %v2320, %v2312
    %v2361 = vpack.c.b16 %v2321, %v2313
    %v2362 = vpack.c.b16 %v2322, %v2314
    %v2363 = vpack.c.b16 %v2323, %v2315
    %v2364 = vpack.c.b16 %v2324, %v2316
    %v2365 = vpack.c.b16 %v2325, %v2317
    %v2366 = vpack.c.b16 %v2334, %v2326
    %v2367 = vpack.c.b16 %v2335, %v2327
    %v2368 = vpack.c.b16 %v2336, %v2328
    %v2369 = vpack.c.b16 %v2337, %v2329
    %v2370 = vpack.c.b16 %v2338, %v2330
    %v2371 = vpack.c.b16 %v2339, %v2331
    %v2372 = vpack.c.b16 %v2340, %v2332
    %v2373 = vpack.c.b16 %v2341, %v2333
    %2406 = vmatprep.subr.bf16.mxu0 0
    %2407 = vmatpush1.bf16.xpose.msra.mxu0 0
    %2408 = vmatprep.subr.bf16.mxu0 0
    %2409 = vmatpush1.bf16.xpose.msra.mxu0 0
    %2410 = vmatprep.subr.bf16.mxu0 0
    %2411 = vmatpush1.bf16.xpose.msra.mxu0 0
    %2412 = vmatprep.subr.bf16.mxu0 0
    %2413 = vmatpush1.bf16.xpose.msra.mxu0 0
    %2414 = vmatprep.subr.bf16.mxu0 %v2367
    %2415 = vmatpush1.bf16.xpose.msra.mxu0 %v2366
    %2416 = vmatprep.subr.bf16.mxu0 %v2359
    %2417 = vmatpush1.bf16.xpose.msra.mxu0 %v2358
    %2418 = vmatprep.subr.bf16.mxu0 %v2351
    %2419 = vmatpush1.bf16.xpose.msra.mxu0 %v2350
    %2420 = vmatprep.subr.bf16.mxu0 %v2343
    %2421 = vmatpush1.bf16.xpose.msra.mxu0 %v2342
    %2422 = vmatprep.subr.bf16.mxu0 0
    %2423 = vmatpush2.bf16.xpose.msra.mxu0 0
    %2424 = vmatprep.subr.bf16.mxu0 0
    %2425 = vmatpush2.bf16.xpose.msra.mxu0 0
    %2426 = vmatprep.subr.bf16.mxu0 0
    %2427 = vmatpush2.bf16.xpose.msra.mxu0 0
    %2428 = vmatprep.subr.bf16.mxu0 0
    %2429 = vmatpush2.bf16.xpose.msra.mxu0 0
    %2430 = vmatprep.subr.bf16.mxu0 0
    %2431 = vmatpush2.bf16.xpose.msra.mxu0 0
    %2432 = vmatprep.subr.bf16.mxu0 0
    %2433 = vmatpush2.bf16.xpose.msra.mxu0 0
    %2434 = vmatprep.subr.bf16.mxu0 0
    %2435 = vmatpush2.bf16.xpose.msra.mxu0 0
    %2436 = vmatprep.subr.bf16.mxu0 0
    %2437 = vmatpush2.bf16.xpose.msra.mxu0 0
    %2438 = vmatprep.mubr.bf16.mxu0 %v2238
    %2439 = vmatmul.mubr.bf16.gmra.mxu0 %v2237
    %v2440 = vpop.f32.mrf.mxu0
    %v2441 = vadd.f32 %v2245, %v2440
    %v2442 = vpop.f32.mrf.mxu0
    %v2443 = vpop.f32.mrf.mxu0
    %v2444 = vpop.f32.mrf.mxu0
    %2445 = vdwg.mxu0
    %2446 = vmatprep.subr.bf16.mxu0 0
    %2447 = vmatpush1.bf16.xpose.msra.mxu0 0
    %2448 = vmatprep.subr.bf16.mxu0 0
    %2449 = vmatpush1.bf16.xpose.msra.mxu0 0
    %2450 = vmatprep.subr.bf16.mxu0 0
    %2451 = vmatpush1.bf16.xpose.msra.mxu0 0
    %2452 = vmatprep.subr.bf16.mxu0 0
    %2453 = vmatpush1.bf16.xpose.msra.mxu0 0
    %2454 = vmatprep.subr.bf16.mxu0 %v2369
    %2455 = vmatpush1.bf16.xpose.msra.mxu0 %v2368
    %2456 = vmatprep.subr.bf16.mxu0 %v2361
    %2457 = vmatpush1.bf16.xpose.msra.mxu0 %v2360
    %2458 = vmatprep.subr.bf16.mxu0 %v2353
    %2459 = vmatpush1.bf16.xpose.msra.mxu0 %v2352
    %2460 = vmatprep.subr.bf16.mxu0 %v2345
    %2461 = vmatpush1.bf16.xpose.msra.mxu0 %v2344
    %2462 = vmatprep.subr.bf16.mxu0 0
    %2463 = vmatpush2.bf16.xpose.msra.mxu0 0
    %2464 = vmatprep.subr.bf16.mxu0 0
    %2465 = vmatpush2.bf16.xpose.msra.mxu0 0
    %2466 = vmatprep.subr.bf16.mxu0 0
    %2467 = vmatpush2.bf16.xpose.msra.mxu0 0
    %2468 = vmatprep.subr.bf16.mxu0 0
    %2469 = vmatpush2.bf16.xpose.msra.mxu0 0
    %2470 = vmatprep.subr.bf16.mxu0 0
    %2471 = vmatpush2.bf16.xpose.msra.mxu0 0
    %2472 = vmatprep.subr.bf16.mxu0 0
    %2473 = vmatpush2.bf16.xpose.msra.mxu0 0
    %2474 = vmatprep.subr.bf16.mxu0 0
    %2475 = vmatpush2.bf16.xpose.msra.mxu0 0
    %2476 = vmatprep.subr.bf16.mxu0 0
    %2477 = vmatpush2.bf16.xpose.msra.mxu0 0
    %2478 = vmatprep.mubr.bf16.mxu0 %v2240
    %2479 = vmatmul.mubr.bf16.gmra.mxu0 %v2239
    %v2480 = vpop.f32.mrf.mxu0
    %v2481 = vadd.f32 %v2441, %v2480
    %v2482 = vpop.f32.mrf.mxu0
    %v2483 = vpop.f32.mrf.mxu0
    %v2484 = vpop.f32.mrf.mxu0
    %2485 = vdwg.mxu0
    %2486 = vmatprep.subr.bf16.mxu0 0
    %2487 = vmatpush1.bf16.xpose.msra.mxu0 0
    %2488 = vmatprep.subr.bf16.mxu0 0
    %2489 = vmatpush1.bf16.xpose.msra.mxu0 0
    %2490 = vmatprep.subr.bf16.mxu0 0
    %2491 = vmatpush1.bf16.xpose.msra.mxu0 0
    %2492 = vmatprep.subr.bf16.mxu0 0
    %2493 = vmatpush1.bf16.xpose.msra.mxu0 0
    %2494 = vmatprep.subr.bf16.mxu0 %v2371
    %2495 = vmatpush1.bf16.xpose.msra.mxu0 %v2370
    %2496 = vmatprep.subr.bf16.mxu0 %v2363
    %2497 = vmatpush1.bf16.xpose.msra.mxu0 %v2362
    %2498 = vmatprep.subr.bf16.mxu0 %v2355
    %2499 = vmatpush1.bf16.xpose.msra.mxu0 %v2354
    %2500 = vmatprep.subr.bf16.mxu0 %v2347
    %2501 = vmatpush1.bf16.xpose.msra.mxu0 %v2346
    %2502 = vmatprep.subr.bf16.mxu0 0
    %2503 = vmatpush2.bf16.xpose.msra.mxu0 0
    %2504 = vmatprep.subr.bf16.mxu0 0
    %2505 = vmatpush2.bf16.xpose.msra.mxu0 0
    %2506 = vmatprep.subr.bf16.mxu0 0
    %2507 = vmatpush2.bf16.xpose.msra.mxu0 0
    %2508 = vmatprep.subr.bf16.mxu0 0
    %2509 = vmatpush2.bf16.xpose.msra.mxu0 0
    %2510 = vmatprep.subr.bf16.mxu0 0
    %2511 = vmatpush2.bf16.xpose.msra.mxu0 0
    %2512 = vmatprep.subr.bf16.mxu0 0
    %2513 = vmatpush2.bf16.xpose.msra.mxu0 0
    %2514 = vmatprep.subr.bf16.mxu0 0
    %2515 = vmatpush2.bf16.xpose.msra.mxu0 0
    %2516 = vmatprep.subr.bf16.mxu0 0
    %2517 = vmatpush2.bf16.xpose.msra.mxu0 0
    %2518 = vmatprep.mubr.bf16.mxu0 %v2242
    %2519 = vmatmul.mubr.bf16.gmra.mxu0 %v2241
    %v2520 = vpop.f32.mrf.mxu0
    %v2521 = vadd.f32 %v2481, %v2520
    %v2522 = vpop.f32.mrf.mxu0
    %v2523 = vpop.f32.mrf.mxu0
    %v2524 = vpop.f32.mrf.mxu0
    %2525 = vdwg.mxu0
    %2526 = vmatprep.subr.bf16.mxu0 0
    %2527 = vmatpush1.bf16.xpose.msra.mxu0 0
    %2528 = vmatprep.subr.bf16.mxu0 0
    %2529 = vmatpush1.bf16.xpose.msra.mxu0 0
    %2530 = vmatprep.subr.bf16.mxu0 0
    %2531 = vmatpush1.bf16.xpose.msra.mxu0 0
    %2532 = vmatprep.subr.bf16.mxu0 0
    %2533 = vmatpush1.bf16.xpose.msra.mxu0 0
    %2534 = vmatprep.subr.bf16.mxu0 %v2373
    %2535 = vmatpush1.bf16.xpose.msra.mxu0 %v2372
    %2536 = vmatprep.subr.bf16.mxu0 %v2365
    %2537 = vmatpush1.bf16.xpose.msra.mxu0 %v2364
    %2538 = vmatprep.subr.bf16.mxu0 %v2357
    %2539 = vmatpush1.bf16.xpose.msra.mxu0 %v2356
    %2540 = vmatprep.subr.bf16.mxu0 %v2349
    %2541 = vmatpush1.bf16.xpose.msra.mxu0 %v2348
    %2542 = vmatprep.subr.bf16.mxu0 0
    %2543 = vmatpush2.bf16.xpose.msra.mxu0 0
    %2544 = vmatprep.subr.bf16.mxu0 0
    %2545 = vmatpush2.bf16.xpose.msra.mxu0 0
    %2546 = vmatprep.subr.bf16.mxu0 0
    %2547 = vmatpush2.bf16.xpose.msra.mxu0 0
    %2548 = vmatprep.subr.bf16.mxu0 0
    %2549 = vmatpush2.bf16.xpose.msra.mxu0 0
    %2550 = vmatprep.subr.bf16.mxu0 0
    %2551 = vmatpush2.bf16.xpose.msra.mxu0 0
    %2552 = vmatprep.subr.bf16.mxu0 0
    %2553 = vmatpush2.bf16.xpose.msra.mxu0 0
    %2554 = vmatprep.subr.bf16.mxu0 0
    %2555 = vmatpush2.bf16.xpose.msra.mxu0 0
    %2556 = vmatprep.subr.bf16.mxu0 0
    %2557 = vmatpush2.bf16.xpose.msra.mxu0 0
    %2558 = vmatprep.mubr.bf16.mxu0 %v2244
    %2559 = vmatmul.mubr.bf16.gmra.mxu0 %v2243
    %v2560 = vpop.f32.mrf.mxu0
    %v2561 = vadd.f32 %v2521, %v2560
    %v2562 = vpop.f32.mrf.mxu0
    %v2563 = vpop.f32.mrf.mxu0
    %v2564 = vpop.f32.mrf.mxu0
    %2565 = vdwg.mxu0
    %v2566 = vlaneseq
    %v2567 = vand.u32 %v2566, 127
    %v2568 = vlaneseq
    %v2569 = vshrl.u32 %v2568, 7
    %s2570 = sld [smem:[#allocation2 + $0x80]]
    %v2571 = vstv %s2570
    %vm2572 = vcmp.eq.s32.totalorder %v2569, 0
    %s2573 = sld [smem:[#allocation2]]
    %v2574 = vstv %s2573
    %v2575 = vsel %vm2572, %v2574, %v2571
    %vm2576 = vcmp.eq.s32.totalorder %v2567, %v2575
    %v2577 = vsel %vm2576, 1, 0
    %v2578 = vcvt.s32.f32 %v2577
    %v2579 = vld [vmem:[#allocation9 + $0x40] sm:$0xff]
    %s2580 = sld [smem:[#allocation2 + $0x81]]
    %v2581 = vstv %s2580
    %s2582 = sld [smem:[#allocation2 + $0x1]]
    %v2583 = vstv %s2582
    %v2584 = vsel %vm2572, %v2583, %v2581
    %vm2585 = vcmp.eq.s32.totalorder %v2567, %v2584
    %v2586 = vsel %vm2585, 1, 0
    %v2587 = vcvt.s32.f32 %v2586
    %v2588 = vld [vmem:[#allocation9 + $0x48] sm:$0xff]
    %vm2589 = vcmask 64512
    %v2591 = vsel %vm2589, %v2587, 0
    %2593 = vmatprep.subr.mxu0 0.0
    %2594 = vmatpush1.msra.mxu0 0.0
    %2595 = vmatprep.subr.mxu0 0.0
    %2596 = vmatpush1.msra.mxu0 0.0
    %2597 = vmatprep.subr.mxu0 0.0
    %2598 = vmatpush1.msra.mxu0 0.0
    %2599 = vmatprep.subr.mxu0 0.0
    %2600 = vmatpush1.msra.mxu0 0.0
    %2601 = vmatprep.subr.mxu0 0.0
    %2602 = vmatpush1.msra.mxu0 0.0
    %2603 = vmatprep.subr.mxu0 0.0
    %2604 = vmatpush1.msra.mxu0 0.0
    %2605 = vmatprep.subr.mxu0 0.0
    %2606 = vmatpush1.msra.mxu0 0.0
    %2607 = vmatprep.subr.mxu0 0.0
    %2608 = vmatpush1.msra.mxu0 0.0
    %2609 = vmatprep.subr.mxu0 0.0
    %2610 = vmatpush1.msra.mxu0 0.0
    %2611 = vmatprep.subr.mxu0 0.0
    %2612 = vmatpush1.msra.mxu0 0.0
    %2613 = vmatprep.subr.mxu0 0.0
    %2614 = vmatpush1.msra.mxu0 0.0
    %2615 = vmatprep.subr.mxu0 0.0
    %2616 = vmatpush1.msra.mxu0 0.0
    %2617 = vmatprep.subr.mxu0 0.0
    %2618 = vmatpush1.msra.mxu0 0.0
    %2619 = vmatprep.subr.mxu0 0.0
    %2620 = vmatpush1.msra.mxu0 0.0
    %2621 = vmatprep.subr.mxu0 0.0
    %2622 = vmatpush1.msra.mxu0 0.0
    %2623 = vmatprep.subr.mxu0 0.0
    %2624 = vmatpush1.msra.mxu0 %v2588
    %2625 = vmatprep.subr.mxu0 0.0
    %2626 = vmatpush2.msra.mxu0 0.0
    %2627 = vmatprep.subr.mxu0 0.0
    %2628 = vmatpush2.msra.mxu0 0.0
    %2629 = vmatprep.subr.mxu0 0.0
    %2630 = vmatpush2.msra.mxu0 0.0
    %2631 = vmatprep.subr.mxu0 0.0
    %2632 = vmatpush2.msra.mxu0 0.0
    %2633 = vmatprep.subr.mxu0 0.0
    %2634 = vmatpush2.msra.mxu0 0.0
    %2635 = vmatprep.subr.mxu0 0.0
    %2636 = vmatpush2.msra.mxu0 0.0
    %2637 = vmatprep.subr.mxu0 0.0
    %2638 = vmatpush2.msra.mxu0 0.0
    %2639 = vmatprep.subr.mxu0 0.0
    %2640 = vmatpush2.msra.mxu0 0.0
    %2641 = vmatprep.subr.mxu0 0.0
    %2642 = vmatpush2.msra.mxu0 0.0
    %2643 = vmatprep.subr.mxu0 0.0
    %2644 = vmatpush2.msra.mxu0 0.0
    %2645 = vmatprep.subr.mxu0 0.0
    %2646 = vmatpush2.msra.mxu0 0.0
    %2647 = vmatprep.subr.mxu0 0.0
    %2648 = vmatpush2.msra.mxu0 0.0
    %2649 = vmatprep.subr.mxu0 0.0
    %2650 = vmatpush2.msra.mxu0 0.0
    %2651 = vmatprep.subr.mxu0 0.0
    %2652 = vmatpush2.msra.mxu0 0.0
    %2653 = vmatprep.subr.mxu0 0.0
    %2654 = vmatpush2.msra.mxu0 0.0
    %2655 = vmatprep.subr.mxu0 0.0
    %2656 = vmatpush2.msra.mxu0 0.0
    %2657 = vmatprep.mubr.f32.mxu0 0.0
    %2658 = vmatmul.mubr.f32.gmra.mxu0 %v2591
    %v2659 = vpop.f32.mrf.mxu0
    %v2660 = vadd.f32 0.0, %v2659
    %v2661 = vpop.f32.mrf.mxu0
    %2662 = vdwg.mxu0
    %v2664 = vsel %vm2589, %v2578, 0
    %2666 = vmatprep.subr.mxu0 0.0
    %2667 = vmatpush1.msra.mxu0 0.0
    %2668 = vmatprep.subr.mxu0 0.0
    %2669 = vmatpush1.msra.mxu0 0.0
    %2670 = vmatprep.subr.mxu0 0.0
    %2671 = vmatpush1.msra.mxu0 0.0
    %2672 = vmatprep.subr.mxu0 0.0
    %2673 = vmatpush1.msra.mxu0 0.0
    %2674 = vmatprep.subr.mxu0 0.0
    %2675 = vmatpush1.msra.mxu0 0.0
    %2676 = vmatprep.subr.mxu0 0.0
    %2677 = vmatpush1.msra.mxu0 0.0
    %2678 = vmatprep.subr.mxu0 0.0
    %2679 = vmatpush1.msra.mxu0 0.0
    %2680 = vmatprep.subr.mxu0 0.0
    %2681 = vmatpush1.msra.mxu0 0.0
    %2682 = vmatprep.subr.mxu0 0.0
    %2683 = vmatpush1.msra.mxu0 0.0
    %2684 = vmatprep.subr.mxu0 0.0
    %2685 = vmatpush1.msra.mxu0 0.0
    %2686 = vmatprep.subr.mxu0 0.0
    %2687 = vmatpush1.msra.mxu0 0.0
    %2688 = vmatprep.subr.mxu0 0.0
    %2689 = vmatpush1.msra.mxu0 0.0
    %2690 = vmatprep.subr.mxu0 0.0
    %2691 = vmatpush1.msra.mxu0 0.0
    %2692 = vmatprep.subr.mxu0 0.0
    %2693 = vmatpush1.msra.mxu0 0.0
    %2694 = vmatprep.subr.mxu0 0.0
    %2695 = vmatpush1.msra.mxu0 0.0
    %2696 = vmatprep.subr.mxu0 0.0
    %2697 = vmatpush1.msra.mxu0 %v2579
    %2698 = vmatprep.subr.mxu0 0.0
    %2699 = vmatpush2.msra.mxu0 0.0
    %2700 = vmatprep.subr.mxu0 0.0
    %2701 = vmatpush2.msra.mxu0 0.0
    %2702 = vmatprep.subr.mxu0 0.0
    %2703 = vmatpush2.msra.mxu0 0.0
    %2704 = vmatprep.subr.mxu0 0.0
    %2705 = vmatpush2.msra.mxu0 0.0
    %2706 = vmatprep.subr.mxu0 0.0
    %2707 = vmatpush2.msra.mxu0 0.0
    %2708 = vmatprep.subr.mxu0 0.0
    %2709 = vmatpush2.msra.mxu0 0.0
    %2710 = vmatprep.subr.mxu0 0.0
    %2711 = vmatpush2.msra.mxu0 0.0
    %2712 = vmatprep.subr.mxu0 0.0
    %2713 = vmatpush2.msra.mxu0 0.0
    %2714 = vmatprep.subr.mxu0 0.0
    %2715 = vmatpush2.msra.mxu0 0.0
    %2716 = vmatprep.subr.mxu0 0.0
    %2717 = vmatpush2.msra.mxu0 0.0
    %2718 = vmatprep.subr.mxu0 0.0
    %2719 = vmatpush2.msra.mxu0 0.0
    %2720 = vmatprep.subr.mxu0 0.0
    %2721 = vmatpush2.msra.mxu0 0.0
    %2722 = vmatprep.subr.mxu0 0.0
    %2723 = vmatpush2.msra.mxu0 0.0
    %2724 = vmatprep.subr.mxu0 0.0
    %2725 = vmatpush2.msra.mxu0 0.0
    %2726 = vmatprep.subr.mxu0 0.0
    %2727 = vmatpush2.msra.mxu0 0.0
    %2728 = vmatprep.subr.mxu0 0.0
    %2729 = vmatpush2.msra.mxu0 0.0
    %2730 = vmatprep.mubr.f32.mxu0 0.0
    %2731 = vmatmul.mubr.f32.gmra.mxu0 %v2664
    %v2732 = vpop.f32.mrf.mxu0
    %v2733 = vadd.f32 %v2660, %v2732
    %v2734 = vpop.f32.mrf.mxu0
    %2735 = vdwg.mxu0
    %v2736 = vld [vmem:[#allocation6 + $0x10] sm:$0xf]
    %v2737 = vld [vmem:[#allocation6 + $0x2c] sm:$0xf]
    %v2738 = vld [vmem:[#allocation6 + $0x48] sm:$0xf]
    %v2739 = vld [vmem:[#allocation6 + $0x64] sm:$0xf]
    %v2740 = vld [vmem:[#allocation6 + $0x80] sm:$0xf]
    %v2741 = vld [vmem:[#allocation6 + $0x9c] sm:$0xf]
    %v2742 = vld [vmem:[#allocation6 + $0xb8] sm:$0xf]
    %v2743 = vld [vmem:[#allocation6 + $0xd4] sm:$0xf]
    %v2744 = vpack.c.bf16 %v2561, %v2561
    %v2753 = vunpack.c.l.b16 %v2736
    %v2754 = vunpack.c.l.b16 %v2737
    %v2755 = vunpack.c.l.b16 %v2738
    %v2756 = vunpack.c.l.b16 %v2739
    %v2757 = vunpack.c.l.b16 %v2740
    %v2758 = vunpack.c.l.b16 %v2741
    %v2759 = vunpack.c.l.b16 %v2742
    %v2760 = vunpack.c.l.b16 %v2743
    %v2761 = vpack.c.b16 %v2754, %v2753
    %v2762 = vpack.c.b16 %v2756, %v2755
    %v2763 = vpack.c.b16 %v2758, %v2757
    %v2764 = vpack.c.b16 %v2760, %v2759
    %v2770 = vsel %vm194, %v2744, 0
    %2772 = vmatprep.subr.bf16.mxu0 0
    %2773 = vmatpush1.bf16.msra.mxu0 0
    %2774 = vmatprep.subr.bf16.mxu0 0
    %2775 = vmatpush1.bf16.msra.mxu0 0
    %2776 = vmatprep.subr.bf16.mxu0 0
    %2777 = vmatpush1.bf16.msra.mxu0 0
    %2778 = vmatprep.subr.bf16.mxu0 0
    %2779 = vmatpush1.bf16.msra.mxu0 0
    %2780 = vmatprep.subr.bf16.mxu0 0
    %2781 = vmatpush1.bf16.msra.mxu0 %v2764
    %2782 = vmatprep.subr.bf16.mxu0 0
    %2783 = vmatpush1.bf16.msra.mxu0 %v2763
    %2784 = vmatprep.subr.bf16.mxu0 0
    %2785 = vmatpush1.bf16.msra.mxu0 %v2762
    %2786 = vmatprep.subr.bf16.mxu0 0
    %2787 = vmatpush1.bf16.msra.mxu0 %v2761
    %2788 = vmatprep.subr.bf16.mxu0 0
    %2789 = vmatpush2.bf16.msra.mxu0 0
    %2790 = vmatprep.subr.bf16.mxu0 0
    %2791 = vmatpush2.bf16.msra.mxu0 0
    %2792 = vmatprep.subr.bf16.mxu0 0
    %2793 = vmatpush2.bf16.msra.mxu0 0
    %2794 = vmatprep.subr.bf16.mxu0 0
    %2795 = vmatpush2.bf16.msra.mxu0 0
    %2796 = vmatprep.subr.bf16.mxu0 0
    %2797 = vmatpush2.bf16.msra.mxu0 0
    %2798 = vmatprep.subr.bf16.mxu0 0
    %2799 = vmatpush2.bf16.msra.mxu0 0
    %2800 = vmatprep.subr.bf16.mxu0 0
    %2801 = vmatpush2.bf16.msra.mxu0 0
    %2802 = vmatprep.subr.bf16.mxu0 0
    %2803 = vmatpush2.bf16.msra.mxu0 0
    %2804 = vmatprep.mubr.bf16.mxu0 0
    %2805 = vmatmul.mubr.bf16.gmra.mxu0 %v2770
    %v2806 = vpop.f32.mrf.mxu0
    %v2807 = vadd.f32 %v2733, %v2806
    %v2808 = vpop.f32.mrf.mxu0
    %v2809 = vpop.f32.mrf.mxu0
    %v2810 = vpop.f32.mrf.mxu0
    %2811 = vdwg.mxu0
    %v2812 = vld [vmem:[#allocation9 + $0xa] ss:$0 sm:$0xff]
    %v2813 = vadd.f32 %v2807, %v2812
    %v2814 = vmax.f32 %v2813, 0.0
    %v2815 = vld [vmem:[#allocation6 + $0x14] sm:$0xf]
    %v2816 = vld [vmem:[#allocation6 + $0x30] sm:$0xf]
    %v2817 = vld [vmem:[#allocation6 + $0x4c] sm:$0xf]
    %v2818 = vld [vmem:[#allocation6 + $0x68] sm:$0xf]
    %v2819 = vld [vmem:[#allocation6 + $0x84] sm:$0xf]
    %v2820 = vld [vmem:[#allocation6 + $0xa0] sm:$0xf]
    %v2821 = vld [vmem:[#allocation6 + $0xbc] sm:$0xf]
    %v2822 = vld [vmem:[#allocation6 + $0xd8] sm:$0xf]
    %v2823 = vld [vmem:[#allocation6 + $0xf4] sm:$0xf]
    %v2824 = vld [vmem:[#allocation6 + $0x110] sm:$0xf]
    %v2825 = vld [vmem:[#allocation6 + $0x12c] sm:$0xf]
    %v2826 = vld [vmem:[#allocation6 + $0x148] sm:$0xf]
    %v2827 = vld [vmem:[#allocation6 + $0x164] sm:$0xf]
    %v2828 = vld [vmem:[#allocation6 + $0x180] sm:$0xf]
    %v2829 = vld [vmem:[#allocation6 + $0x19c] sm:$0xf]
    %v2830 = vld [vmem:[#allocation6 + $0x1b8] sm:$0xf]
    %v2831 = vpack.c.bf16 %v2814, %v2814
    %v2832 = vld [vmem:[#allocation9 + $0x12] ss:$0 sm:$0xff]
    %v2849 = vunpack.c.l.b16 %v2815
    %v2850 = vunpack.c.l.b16 %v2816
    %v2851 = vunpack.c.l.b16 %v2817
    %v2852 = vunpack.c.l.b16 %v2818
    %v2853 = vunpack.c.l.b16 %v2819
    %v2854 = vunpack.c.l.b16 %v2820
    %v2855 = vunpack.c.l.b16 %v2821
    %v2856 = vunpack.c.l.b16 %v2822
    %v2857 = vunpack.c.l.b16 %v2823
    %v2858 = vunpack.c.l.b16 %v2824
    %v2859 = vunpack.c.l.b16 %v2825
    %v2860 = vunpack.c.l.b16 %v2826
    %v2861 = vunpack.c.l.b16 %v2827
    %v2862 = vunpack.c.l.b16 %v2828
    %v2863 = vunpack.c.l.b16 %v2829
    %v2864 = vunpack.c.l.b16 %v2830
    %v2865 = vpack.c.b16 %v2850, %v2849
    %v2866 = vpack.c.b16 %v2852, %v2851
    %v2867 = vpack.c.b16 %v2854, %v2853
    %v2868 = vpack.c.b16 %v2856, %v2855
    %v2869 = vpack.c.b16 %v2858, %v2857
    %v2870 = vpack.c.b16 %v2860, %v2859
    %v2871 = vpack.c.b16 %v2862, %v2861
    %v2872 = vpack.c.b16 %v2864, %v2863
    %2881 = vmatprep.subr.bf16.mxu0 0
    %2882 = vmatpush1.bf16.msra.mxu0 %v2872
    %2883 = vmatprep.subr.bf16.mxu0 0
    %2884 = vmatpush1.bf16.msra.mxu0 %v2871
    %2885 = vmatprep.subr.bf16.mxu0 0
    %2886 = vmatpush1.bf16.msra.mxu0 %v2870
    %2887 = vmatprep.subr.bf16.mxu0 0
    %2888 = vmatpush1.bf16.msra.mxu0 %v2869
    %2889 = vmatprep.subr.bf16.mxu0 0
    %2890 = vmatpush1.bf16.msra.mxu0 %v2868
    %2891 = vmatprep.subr.bf16.mxu0 0
    %2892 = vmatpush1.bf16.msra.mxu0 %v2867
    %2893 = vmatprep.subr.bf16.mxu0 0
    %2894 = vmatpush1.bf16.msra.mxu0 %v2866
    %2895 = vmatprep.subr.bf16.mxu0 0
    %2896 = vmatpush1.bf16.msra.mxu0 %v2865
    %2897 = vmatprep.subr.bf16.mxu0 0
    %2898 = vmatpush2.bf16.msra.mxu0 0
    %2899 = vmatprep.subr.bf16.mxu0 0
    %2900 = vmatpush2.bf16.msra.mxu0 0
    %2901 = vmatprep.subr.bf16.mxu0 0
    %2902 = vmatpush2.bf16.msra.mxu0 0
    %2903 = vmatprep.subr.bf16.mxu0 0
    %2904 = vmatpush2.bf16.msra.mxu0 0
    %2905 = vmatprep.subr.bf16.mxu0 0
    %2906 = vmatpush2.bf16.msra.mxu0 0
    %2907 = vmatprep.subr.bf16.mxu0 0
    %2908 = vmatpush2.bf16.msra.mxu0 0
    %2909 = vmatprep.subr.bf16.mxu0 0
    %2910 = vmatpush2.bf16.msra.mxu0 0
    %2911 = vmatprep.subr.bf16.mxu0 0
    %2912 = vmatpush2.bf16.msra.mxu0 0
    %2913 = vmatprep.mubr.bf16.mxu0 0
    %2914 = vmatmul.mubr.bf16.gmra.mxu0 %v2831
    %v2915 = vpop.f32.mrf.mxu0
    %v2916 = vadd.f32 %v2832, %v2915
    %v2917 = vpop.f32.mrf.mxu0
    %v2918 = vpop.f32.mrf.mxu0
    %v2919 = vpop.f32.mrf.mxu0
    %2920 = vdwg.mxu0
    %v2921 = vmax.f32 %v2916, 0.0
    %v2922 = vld [vmem:[#allocation6 + $0x18] sm:$0xf]
    %v2923 = vld [vmem:[#allocation6 + $0x34] sm:$0xf]
    %v2924 = vld [vmem:[#allocation6 + $0x50] sm:$0xf]
    %v2925 = vld [vmem:[#allocation6 + $0x6c] sm:$0xf]
    %v2926 = vld [vmem:[#allocation6 + $0x88] sm:$0xf]
    %v2927 = vld [vmem:[#allocation6 + $0xa4] sm:$0xf]
    %v2928 = vld [vmem:[#allocation6 + $0xc0] sm:$0xf]
    %v2929 = vld [vmem:[#allocation6 + $0xdc] sm:$0xf]
    %v2930 = vld [vmem:[#allocation6 + $0xf8] sm:$0xf]
    %v2931 = vld [vmem:[#allocation6 + $0x114] sm:$0xf]
    %v2932 = vld [vmem:[#allocation6 + $0x130] sm:$0xf]
    %v2933 = vld [vmem:[#allocation6 + $0x14c] sm:$0xf]
    %v2934 = vld [vmem:[#allocation6 + $0x168] sm:$0xf]
    %v2935 = vld [vmem:[#allocation6 + $0x184] sm:$0xf]
    %v2936 = vld [vmem:[#allocation6 + $0x1a0] sm:$0xf]
    %v2937 = vld [vmem:[#allocation6 + $0x1bc] sm:$0xf]
    %v2938 = vpack.c.bf16 %v2921, %v2921
    %v2939 = vld [vmem:[#allocation9 + $0x1a] ss:$0 sm:$0xff]
    %v2956 = vunpack.c.l.b16 %v2922
    %v2957 = vunpack.c.l.b16 %v2923
    %v2958 = vunpack.c.l.b16 %v2924
    %v2959 = vunpack.c.l.b16 %v2925
    %v2960 = vunpack.c.l.b16 %v2926
    %v2961 = vunpack.c.l.b16 %v2927
    %v2962 = vunpack.c.l.b16 %v2928
    %v2963 = vunpack.c.l.b16 %v2929
    %v2964 = vunpack.c.l.b16 %v2930
    %v2965 = vunpack.c.l.b16 %v2931
    %v2966 = vunpack.c.l.b16 %v2932
    %v2967 = vunpack.c.l.b16 %v2933
    %v2968 = vunpack.c.l.b16 %v2934
    %v2969 = vunpack.c.l.b16 %v2935
    %v2970 = vunpack.c.l.b16 %v2936
    %v2971 = vunpack.c.l.b16 %v2937
    %v2972 = vpack.c.b16 %v2957, %v2956
    %v2973 = vpack.c.b16 %v2959, %v2958
    %v2974 = vpack.c.b16 %v2961, %v2960
    %v2975 = vpack.c.b16 %v2963, %v2962
    %v2976 = vpack.c.b16 %v2965, %v2964
    %v2977 = vpack.c.b16 %v2967, %v2966
    %v2978 = vpack.c.b16 %v2969, %v2968
    %v2979 = vpack.c.b16 %v2971, %v2970
    %2988 = vmatprep.subr.bf16.mxu0 0
    %2989 = vmatpush1.bf16.msra.mxu0 %v2979
    %2990 = vmatprep.subr.bf16.mxu0 0
    %2991 = vmatpush1.bf16.msra.mxu0 %v2978
    %2992 = vmatprep.subr.bf16.mxu0 0
    %2993 = vmatpush1.bf16.msra.mxu0 %v2977
    %2994 = vmatprep.subr.bf16.mxu0 0
    %2995 = vmatpush1.bf16.msra.mxu0 %v2976
    %2996 = vmatprep.subr.bf16.mxu0 0
    %2997 = vmatpush1.bf16.msra.mxu0 %v2975
    %2998 = vmatprep.subr.bf16.mxu0 0
    %2999 = vmatpush1.bf16.msra.mxu0 %v2974
    %3000 = vmatprep.subr.bf16.mxu0 0
    %3001 = vmatpush1.bf16.msra.mxu0 %v2973
    %3002 = vmatprep.subr.bf16.mxu0 0
    %3003 = vmatpush1.bf16.msra.mxu0 %v2972
    %3004 = vmatprep.subr.bf16.mxu0 0
    %3005 = vmatpush2.bf16.msra.mxu0 0
    %3006 = vmatprep.subr.bf16.mxu0 0
    %3007 = vmatpush2.bf16.msra.mxu0 0
    %3008 = vmatprep.subr.bf16.mxu0 0
    %3009 = vmatpush2.bf16.msra.mxu0 0
    %3010 = vmatprep.subr.bf16.mxu0 0
    %3011 = vmatpush2.bf16.msra.mxu0 0
    %3012 = vmatprep.subr.bf16.mxu0 0
    %3013 = vmatpush2.bf16.msra.mxu0 0
    %3014 = vmatprep.subr.bf16.mxu0 0
    %3015 = vmatpush2.bf16.msra.mxu0 0
    %3016 = vmatprep.subr.bf16.mxu0 0
    %3017 = vmatpush2.bf16.msra.mxu0 0
    %3018 = vmatprep.subr.bf16.mxu0 0
    %3019 = vmatpush2.bf16.msra.mxu0 0
    %3020 = vmatprep.mubr.bf16.mxu0 0
    %3021 = vmatmul.mubr.bf16.gmra.mxu0 %v2938
    %v3022 = vpop.f32.mrf.mxu0
    %v3023 = vadd.f32 %v2939, %v3022
    %v3024 = vpop.f32.mrf.mxu0
    %v3025 = vpop.f32.mrf.mxu0
    %v3026 = vpop.f32.mrf.mxu0
    %3027 = vdwg.mxu0
    %vm3028 = vcmask 517120
    %3029 = vst.msk [vmem:[#allocation10] sm:$0x3] %vm3028, %v3023
    // Predicated region
    $region38: #{grid_predictor_forward.1} parent=1 // pred_check
      _
    $region39: #{grid_predictor_forward.1} parent=1 // pred_check_branch
      %3031 = sbr.rel (0) target = $region41
    $region40: #{grid_predictor_forward.1} parent=1 // pred_region
      %s3033 = ssub.s32 32, 32
      %3034 = vsyncadd [#allocation4], %s3033
      %s3036 = sshll.u32 [#allocation10], 4
      %s3037 = int_to_ptr.vmem [resolvable:$true] %s3036
      %3039 = dma.vmem_to_hbm [thread:$0]  %s3037, 32, %s5, [#allocation4]
    $region41: #{grid_predictor_forward.1} parent=1 // pred_fallthru
      _
    // Predicated region
    $region42: #{grid_predictor_forward.1} parent=1 // pred_check
      _
    $region43: #{grid_predictor_forward.1} parent=1 // pred_check_branch
      %3041 = sbr.rel (0) target = $region45
    $region44: #{grid_predictor_forward.1} parent=1 // pred_region
      %3042 = dma.done [#allocation4], 32
    $region45: #{grid_predictor_forward.1} parent=1 // pred_fallthru
      _
    %3043 = vsyncpa [#allocation3], 1
    %3044 = vsyncpa [#allocation8], 1
    %3045 = vsyncpa [#allocation4], 1
    %3046 = vsyncpa [#allocation5], 1

</llo_original>
